<compile_context>
chip_gen: v7x
topology: tpu7x:2x2x1
jax: 0.10.0
libtpu: 0.0.40
codegen_flags: <defaults>
</compile_context>

<pallas_src>
import jax
import jax.numpy as jnp
from jax.experimental import pallas as pl
from jax.experimental.pallas import tpu as pltpu

IN_V = 6
K_PAD = 8            # layer-1 K padded to the sublane tile (6 data + 1 ones + 1 zero)
HIDDEN = IN_V * 64   # 384
OUT = 2
OUT_PAD = 128        # lane-dense output width


def _round_up(v, m):
    return (v + m - 1) // m * m


def _sigmoid(h):
    # exp and approximate reciprocal both issue on the EUP slot.
    return pl.reciprocal(1.0 + jnp.exp(-h), approx=True)


def _mlp_kernel(x_ref,
                w1_ref,
                w2_ref, b2_ref,
                w3_ref, b3_ref,
                w4_ref, b4_ref,
                o_ref):
    """Fused 4-layer MLP; weights resident in VMEM, batch tiled on the grid."""
    x = x_ref[...]                                           # (TB, 8) f32

    # Layer 1: bias is folded into w1 via the ones column of x.
    h = jnp.dot(x, w1_ref[...], preferred_element_type=jnp.float32)
    h = _sigmoid(h)                                          # dropout (eval) == identity

    # Layers 2/3: bf16 inputs into the MXU, f32 accumulation, f32 elementwise.
    h = jnp.dot(h.astype(jnp.bfloat16), w2_ref[...],
                preferred_element_type=jnp.float32) + b2_ref[...]
    h = _sigmoid(h)                                          # dropout (eval) == identity

    h = jnp.dot(h.astype(jnp.bfloat16), w3_ref[...],
                preferred_element_type=jnp.float32) + b3_ref[...]
    h = _sigmoid(h)                                          # dropout (eval) == identity

    # Layer 4: padded to 128 lanes (padded columns are zero) for lane-dense stores.
    h = jnp.dot(h, w4_ref[...], preferred_element_type=jnp.float32) + b4_ref[...]
    o_ref[...] = _sigmoid(h).astype(o_ref.dtype)


def _pack_params(params):
    """Fold/pad/cast raw (PyTorch-layout-transposed) params into kernel layout."""
    w1, b1 = params["w1"], params["b1"]          # (6,384), (1,384)
    w2, b2 = params["w2"], params["b2"]          # (384,384), (1,384)
    w3, b3 = params["w3"], params["b3"]
    w4, b4 = params["w4"], params["b4"]          # (384,2), (1,2)

    # Layer 1: append bias row + zero row -> (8, 384).
    w1_aug = jnp.concatenate(
        [w1, b1, jnp.zeros((K_PAD - IN_V - 1, HIDDEN), jnp.float32)], axis=0)

    # Layers 2/3: bf16 weights (f32 accumulation inside the kernel).
    w2_bf = w2.astype(jnp.bfloat16)
    w3_bf = w3.astype(jnp.bfloat16)

    # Layer 4: pad N from 2 -> 128 with exact zeros.
    w4_pad = jnp.zeros((HIDDEN, OUT_PAD), jnp.float32).at[:, :OUT].set(w4)
    b4_pad = jnp.zeros((1, OUT_PAD), jnp.float32).at[:, :OUT].set(b4)

    return w1_aug, w2_bf, b2, w3_bf, b3, w4_pad, b4_pad


def net_forward(x, params):
    """x: (B, 6) float32.  params: dict of weights/biases.  Returns (B, 2) float32."""
    B = x.shape[0]
    TB = min(512, _round_up(max(B, 1), 8))       # batch tile (rows), sublane-aligned
    B_pad = _round_up(B, TB)
    n_tiles = B_pad // TB

    w1_aug, w2_bf, b2, w3_bf, b3, w4_pad, b4_pad = _pack_params(params)

    # Augment x: [x | 1 | 0] -> (B, 8), then zero-pad batch to B_pad.
    x_aug = jnp.concatenate(
        [x.astype(jnp.float32),
         jnp.ones((B, 1), jnp.float32),
         jnp.zeros((B, K_PAD - IN_V - 1), jnp.float32)], axis=1)
    x_aug = jnp.pad(x_aug, ((0, B_pad - B), (0, 0)))

    flops = 2 * B_pad * (K_PAD * HIDDEN + 2 * HIDDEN * HIDDEN + HIDDEN * OUT_PAD)
    transcendentals = B_pad * (3 * HIDDEN + OUT_PAD)
    bytes_accessed = (x_aug.size * 4 + B_pad * OUT_PAD * 4
                      + w1_aug.size * 4 + w2_bf.size * 2 + w3_bf.size * 2
                      + w4_pad.size * 4 + b2.size * 4 + b3.size * 4 + b4_pad.size * 4)

    out_pad = pl.pallas_call(
        _mlp_kernel,
        out_shape=jax.ShapeDtypeStruct((B_pad, OUT_PAD), jnp.float32),
        grid=(n_tiles,),
        in_specs=[
            pl.BlockSpec((TB, K_PAD), lambda i: (i, 0)),          # x tile
            pl.BlockSpec((K_PAD, HIDDEN), lambda i: (0, 0)),      # w1 (resident)
            pl.BlockSpec((HIDDEN, HIDDEN), lambda i: (0, 0)),     # w2 bf16 (resident)
            pl.BlockSpec((1, HIDDEN), lambda i: (0, 0)),          # b2
            pl.BlockSpec((HIDDEN, HIDDEN), lambda i: (0, 0)),     # w3 bf16 (resident)
            pl.BlockSpec((1, HIDDEN), lambda i: (0, 0)),          # b3
            pl.BlockSpec((HIDDEN, OUT_PAD), lambda i: (0, 0)),    # w4 padded (resident)
            pl.BlockSpec((1, OUT_PAD), lambda i: (0, 0)),         # b4 padded
        ],
        out_specs=pl.BlockSpec((TB, OUT_PAD), lambda i: (i, 0)),
        compiler_params=pltpu.CompilerParams(
            dimension_semantics=("parallel",),
            vmem_limit_bytes=48 << 20),
        cost_estimate=pl.CostEstimate(
            flops=flops,
            transcendentals=transcendentals,
            bytes_accessed=bytes_accessed),
    )(x_aug, w1_aug, w2_bf, b2, w3_bf, b3, w4_pad, b4_pad)

    return out_pad[:B, :OUT]


def init_params(key):
    """Deterministic init mimicking PyTorch nn.Linear (uniform +-1/sqrt(fan_in))."""
    def linear(key, fan_in, fan_out):
        kw, kb = jax.random.split(key)
        bound = 1.0 / jnp.sqrt(jnp.float32(fan_in))
        w = jax.random.uniform(kw, (fan_in, fan_out), jnp.float32, -bound, bound)
        b = jax.random.uniform(kb, (1, fan_out), jnp.float32, -bound, bound)
        return w, b

    k1, k2, k3, k4 = jax.random.split(key, 4)
    w1, b1 = linear(k1, IN_V, HIDDEN)
    w2, b2 = linear(k2, HIDDEN, HIDDEN)
    w3, b3 = linear(k3, HIDDEN, HIDDEN)
    w4, b4 = linear(k4, HIDDEN, OUT)
    return dict(w1=w1, b1=b1, w2=w2, b2=b2, w3=w3, b3=b3, w4=w4, b4=b4)


def _reference(x, p):
    """Pure-f32 JAX reference matching the PyTorch module in eval mode."""
    h = jax.nn.sigmoid(x @ p["w1"] + p["b1"])
    h = jax.nn.sigmoid(h @ p["w2"] + p["b2"])
    h = jax.nn.sigmoid(h @ p["w3"] + p["b3"])
    return jax.nn.sigmoid(h @ p["w4"] + p["b4"])


if __name__ == "__main__":
    key = jax.random.PRNGKey(0)
    kx, kp = jax.random.split(key)

    B = 8
    x = jax.random.normal(kx, (B, IN_V), dtype=jnp.float32)
    params = init_params(kp)

    out = net_forward(x, params)
    out = jax.block_until_ready(out)

    ref = _reference(x, params)
    assert out.shape == (B, OUT)
    # bf16 hidden layers + approx EUP reciprocal -> relaxed tolerance vs f32 ref.
    assert jnp.allclose(out, ref, atol=2e-2, rtol=2e-2), "mismatch vs JAX reference"

    print("KERNEL_OK")
</pallas_src>

<mosaic_0001>
module attributes {stable_mosaic.version = 11 : i64} {
  func.func @_mlp_kernel(%arg0: i32, %arg1: memref<8x8xf32, #tpu.memory_space<vmem>>, %arg2: memref<8x384xf32, #tpu.memory_space<vmem>>, %arg3: memref<384x384xbf16, #tpu.memory_space<vmem>>, %arg4: memref<1x384xf32, #tpu.memory_space<vmem>>, %arg5: memref<384x384xbf16, #tpu.memory_space<vmem>>, %arg6: memref<1x384xf32, #tpu.memory_space<vmem>>, %arg7: memref<384x128xf32, #tpu.memory_space<vmem>>, %arg8: memref<1x128xf32, #tpu.memory_space<vmem>>, %arg9: memref<8x128xf32, #tpu.memory_space<vmem>>) attributes {dimension_semantics = [#tpu.dimension_semantics<parallel>], iteration_bounds = array<i64: 1>, scalar_prefetch = 0 : i64, scratch_operands = 0 : i64, tpu.core_type = #tpu.core_type<tc>, window_params = [{transform_indices = @transform_0, window_bounds = array<i64: 8, 8>}, {pipeline_mode = #tpu.pipeline_mode<synchronous>, transform_indices = @transform_1, window_bounds = array<i64: 8, 384>}, {pipeline_mode = #tpu.pipeline_mode<synchronous>, transform_indices = @transform_2, window_bounds = array<i64: 384, 384>}, {pipeline_mode = #tpu.pipeline_mode<synchronous>, transform_indices = @transform_3, window_bounds = array<i64: 1, 384>}, {pipeline_mode = #tpu.pipeline_mode<synchronous>, transform_indices = @transform_4, window_bounds = array<i64: 384, 384>}, {pipeline_mode = #tpu.pipeline_mode<synchronous>, transform_indices = @transform_5, window_bounds = array<i64: 1, 384>}, {pipeline_mode = #tpu.pipeline_mode<synchronous>, transform_indices = @transform_6, window_bounds = array<i64: 384, 128>}, {pipeline_mode = #tpu.pipeline_mode<synchronous>, transform_indices = @transform_7, window_bounds = array<i64: 1, 128>}, {transform_indices = @transform_8, window_bounds = array<i64: 8, 128>}]} {
    %c0 = arith.constant 0 : index
    %c0_0 = arith.constant 0 : index
    %0 = vector.load %arg1[%c0, %c0_0] : memref<8x8xf32, #tpu.memory_space<vmem>>, vector<8x8xf32>
    %c0_1 = arith.constant 0 : index
    %c0_2 = arith.constant 0 : index
    %1 = vector.load %arg2[%c0_1, %c0_2] : memref<8x384xf32, #tpu.memory_space<vmem>>, vector<8x384xf32>
    %cst = arith.constant dense<0.000000e+00> : vector<8x384xf32>
    %2 = tpu.matmul %0, %1, %cst {dimension_numbers = #tpu.dot_dimension_numbers<[1], [0], [0], [1], [0, 0, 1, 1], [], []>} : vector<8x8xf32>, vector<8x384xf32>, vector<8x384xf32> -> vector<8x384xf32>
    %cst_3 = arith.constant 0.000000e+00 : f32
    %3 = vector.broadcast %cst_3 : f32 to vector<8x384xf32>
    %4 = arith.subf %3, %2 : vector<8x384xf32>
    %5 = math.exp %4 : vector<8x384xf32>
    %cst_4 = arith.constant 1.000000e+00 : f32
    %6 = vector.broadcast %cst_4 : f32 to vector<8x384xf32>
    %7 = arith.addf %6, %5 : vector<8x384xf32>
    %8 = tpu.reciprocal %7 {approx = true} : vector<8x384xf32> -> vector<8x384xf32>
    %9 = arith.truncf %8 : vector<8x384xf32> to vector<8x384xbf16>
    %c0_5 = arith.constant 0 : index
    %c0_6 = arith.constant 0 : index
    %10 = vector.load %arg3[%c0_5, %c0_6] : memref<384x384xbf16, #tpu.memory_space<vmem>>, vector<384x384xbf16>
    %cst_7 = arith.constant dense<0.000000e+00> : vector<8x384xf32>
    %11 = tpu.matmul %9, %10, %cst_7 {dimension_numbers = #tpu.dot_dimension_numbers<[1], [0], [0], [1], [0, 0, 1, 1], [], []>} : vector<8x384xbf16>, vector<384x384xbf16>, vector<8x384xf32> -> vector<8x384xf32>
    %c0_8 = arith.constant 0 : index
    %c0_9 = arith.constant 0 : index
    %12 = vector.load %arg4[%c0_8, %c0_9] : memref<1x384xf32, #tpu.memory_space<vmem>>, vector<1x384xf32>
    %13 = vector.broadcast %12 : vector<1x384xf32> to vector<8x384xf32>
    %14 = arith.addf %11, %13 : vector<8x384xf32>
    %cst_10 = arith.constant 0.000000e+00 : f32
    %15 = vector.broadcast %cst_10 : f32 to vector<8x384xf32>
    %16 = arith.subf %15, %14 : vector<8x384xf32>
    %17 = math.exp %16 : vector<8x384xf32>
    %cst_11 = arith.constant 1.000000e+00 : f32
    %18 = vector.broadcast %cst_11 : f32 to vector<8x384xf32>
    %19 = arith.addf %18, %17 : vector<8x384xf32>
    %20 = tpu.reciprocal %19 {approx = true} : vector<8x384xf32> -> vector<8x384xf32>
    %21 = arith.truncf %20 : vector<8x384xf32> to vector<8x384xbf16>
    %c0_12 = arith.constant 0 : index
    %c0_13 = arith.constant 0 : index
    %22 = vector.load %arg5[%c0_12, %c0_13] : memref<384x384xbf16, #tpu.memory_space<vmem>>, vector<384x384xbf16>
    %cst_14 = arith.constant dense<0.000000e+00> : vector<8x384xf32>
    %23 = tpu.matmul %21, %22, %cst_14 {dimension_numbers = #tpu.dot_dimension_numbers<[1], [0], [0], [1], [0, 0, 1, 1], [], []>} : vector<8x384xbf16>, vector<384x384xbf16>, vector<8x384xf32> -> vector<8x384xf32>
    %c0_15 = arith.constant 0 : index
    %c0_16 = arith.constant 0 : index
    %24 = vector.load %arg6[%c0_15, %c0_16] : memref<1x384xf32, #tpu.memory_space<vmem>>, vector<1x384xf32>
    %25 = vector.broadcast %24 : vector<1x384xf32> to vector<8x384xf32>
    %26 = arith.addf %23, %25 : vector<8x384xf32>
    %cst_17 = arith.constant 0.000000e+00 : f32
    %27 = vector.broadcast %cst_17 : f32 to vector<8x384xf32>
    %28 = arith.subf %27, %26 : vector<8x384xf32>
    %29 = math.exp %28 : vector<8x384xf32>
    %cst_18 = arith.constant 1.000000e+00 : f32
    %30 = vector.broadcast %cst_18 : f32 to vector<8x384xf32>
    %31 = arith.addf %30, %29 : vector<8x384xf32>
    %32 = tpu.reciprocal %31 {approx = true} : vector<8x384xf32> -> vector<8x384xf32>
    %c0_19 = arith.constant 0 : index
    %c0_20 = arith.constant 0 : index
    %33 = vector.load %arg7[%c0_19, %c0_20] : memref<384x128xf32, #tpu.memory_space<vmem>>, vector<384x128xf32>
    %cst_21 = arith.constant dense<0.000000e+00> : vector<8x128xf32>
    %34 = tpu.matmul %32, %33, %cst_21 {dimension_numbers = #tpu.dot_dimension_numbers<[1], [0], [0], [1], [0, 0, 1, 1], [], []>} : vector<8x384xf32>, vector<384x128xf32>, vector<8x128xf32> -> vector<8x128xf32>
    %c0_22 = arith.constant 0 : index
    %c0_23 = arith.constant 0 : index
    %35 = vector.load %arg8[%c0_22, %c0_23] : memref<1x128xf32, #tpu.memory_space<vmem>>, vector<1x128xf32>
    %36 = vector.broadcast %35 : vector<1x128xf32> to vector<8x128xf32>
    %37 = arith.addf %34, %36 : vector<8x128xf32>
    %cst_24 = arith.constant 0.000000e+00 : f32
    %38 = vector.broadcast %cst_24 : f32 to vector<8x128xf32>
    %39 = arith.subf %38, %37 : vector<8x128xf32>
    %40 = math.exp %39 : vector<8x128xf32>
    %cst_25 = arith.constant 1.000000e+00 : f32
    %41 = vector.broadcast %cst_25 : f32 to vector<8x128xf32>
    %42 = arith.addf %41, %40 : vector<8x128xf32>
    %43 = tpu.reciprocal %42 {approx = true} : vector<8x128xf32> -> vector<8x128xf32>
    %c0_26 = arith.constant 0 : index
    %c0_27 = arith.constant 0 : index
    %44 = vector.load %arg9[%c0_26, %c0_27] : memref<8x128xf32, #tpu.memory_space<vmem>>, vector<8x128xf32>
    tpu.vector_store %arg9[%c0_26, %c0_27], %43 {strides = array<i32>} : memref<8x128xf32, #tpu.memory_space<vmem>>, vector<8x128xf32>,
    return
  }
  func.func @transform_0(%arg0: i32) -> (i32, i32) {
    %c0_i32 = arith.constant 0 : i32
    %c0_i32_0 = arith.constant 0 : i32
    return %arg0, %c0_i32 : i32, i32
  }
  func.func @transform_1(%arg0: i32) -> (i32, i32) {
    %c0_i32 = arith.constant 0 : i32
    %c0_i32_0 = arith.constant 0 : i32
    %c0_i32_1 = arith.constant 0 : i32
    return %c0_i32, %c0_i32_0 : i32, i32
  }
  func.func @transform_2(%arg0: i32) -> (i32, i32) {
    %c0_i32 = arith.constant 0 : i32
    %c0_i32_0 = arith.constant 0 : i32
    %c0_i32_1 = arith.constant 0 : i32
    return %c0_i32, %c0_i32_0 : i32, i32
  }
  func.func @transform_3(%arg0: i32) -> (i32, i32) {
    %c0_i32 = arith.constant 0 : i32
    %c0_i32_0 = arith.constant 0 : i32
    %c0_i32_1 = arith.constant 0 : i32
    return %c0_i32, %c0_i32_0 : i32, i32
  }
  func.func @transform_4(%arg0: i32) -> (i32, i32) {
    %c0_i32 = arith.constant 0 : i32
    %c0_i32_0 = arith.constant 0 : i32
    %c0_i32_1 = arith.constant 0 : i32
    return %c0_i32, %c0_i32_0 : i32, i32
  }
  func.func @transform_5(%arg0: i32) -> (i32, i32) {
    %c0_i32 = arith.constant 0 : i32
    %c0_i32_0 = arith.constant 0 : i32
    %c0_i32_1 = arith.constant 0 : i32
    return %c0_i32, %c0_i32_0 : i32, i32
  }
  func.func @transform_6(%arg0: i32) -> (i32, i32) {
    %c0_i32 = arith.constant 0 : i32
    %c0_i32_0 = arith.constant 0 : i32
    %c0_i32_1 = arith.constant 0 : i32
    return %c0_i32, %c0_i32_0 : i32, i32
  }
  func.func @transform_7(%arg0: i32) -> (i32, i32) {
    %c0_i32 = arith.constant 0 : i32
    %c0_i32_0 = arith.constant 0 : i32
    %c0_i32_1 = arith.constant 0 : i32
    return %c0_i32, %c0_i32_0 : i32, i32
  }
  func.func @transform_8(%arg0: i32) -> (i32, i32) {
    %c0_i32 = arith.constant 0 : i32
    %c0_i32_0 = arith.constant 0 : i32
    return %arg0, %c0_i32 : i32, i32
  }
}

</mosaic_0001>

<llo_original>
// kernel: tpu_custom_call.1
$region0: #{tpu_custom_call.1}
  #allocation0 [shape = 'u32[]', space=smem, size = 0x4, offset = 0x4, fixed_abs, tag = 'smem constant byte address 0x4 - core index']
  #allocation1 [shape = 'u32[144,128]{1,0:T(1,128)}', space=vmem, size = 0x12000, scoped, tag = 'internal scratch']
  %s0 = inlined_call_operand.hbm [shape: f32[8,8], index: 0, kind: input, shape index: {}]
  %s1 = inlined_call_operand.hbm [shape: f32[8,384], index: 1, kind: input, shape index: {}]
  %s2 = inlined_call_operand.hbm [shape: bf16[384,384], index: 2, kind: input, shape index: {}]
  %s3 = inlined_call_operand.vmem [shape: f32[1,384], index: 3, kind: input, shape index: {}]
  %s4 = inlined_call_operand.hbm [shape: bf16[384,384], index: 4, kind: input, shape index: {}]
  %s5 = inlined_call_operand.vmem [shape: f32[1,384], index: 5, kind: input, shape index: {}]
  %s6 = inlined_call_operand.hbm [shape: f32[384,128], index: 6, kind: input, shape index: {}]
  %s7 = inlined_call_operand.vmem [shape: f32[1,128], index: 7, kind: input, shape index: {}]
  %s8 = inlined_call_operand.hbm [shape: f32[8,128], index: 8, kind: output, shape index: {}]
  %s9 = sld [smem:[#allocation0]]
  $region62: #{tpu_custom_call.1} parent=0
    _
  %s11 = ssub.s32 1, %s9
  %s12 = scalar_select 0, %s11, %s9
  $region1: #{tpu_custom_call.1} parent=0
    #allocation2 [shape = 'u8[4096]{0}', space=vmem, size = 0x1000, scoped, tag = 'input window, operand 0, single buffered']
    #allocation3 [shape = 's32[1]{0}', space=sflag, size = 0x4, scoped, tag = 'scoped memory for tpu_custom_call.1']
    #allocation4 [shape = 's32[1]{0}', space=sflag, size = 0x4, scoped, tag = 'scoped memory for tpu_custom_call.1']
    #allocation5 [shape = 'u8[12288]{0}', space=vmem, size = 0x3000, scoped, tag = 'input window, operand 1, single buffered']
    #allocation6 [shape = 's32[1]{0}', space=sflag, size = 0x4, scoped, tag = 'scoped memory for tpu_custom_call.1']
    #allocation7 [shape = 'u8[294912]{0}', space=vmem, size = 0x48000, scoped, tag = 'input window, operand 2, single buffered']
    #allocation8 [shape = 'u8[294912]{0}', space=vmem, size = 0x48000, scoped, tag = 'input window, operand 4, single buffered']
    #allocation9 [shape = 's32[1]{0}', space=sflag, size = 0x4, scoped, tag = 'scoped memory for tpu_custom_call.1']
    #allocation10 [shape = 'u8[196608]{0}', space=vmem, size = 0x30000, scoped, tag = 'input window, operand 6, single buffered']
    #allocation11 [shape = 'u8[4096]{0}', space=vmem, size = 0x1000, scoped, tag = 'output window, operand 0, single buffered']
    %13 = vsyncpa [#allocation3], 0
    %14 = vsyncpa [#allocation6], 0
    %15 = vsyncpa [#allocation9], 0
    %16 = vsyncpa [#allocation4], 0
    // Predicated region
    $region2: #{tpu_custom_call.1} parent=1 // pred_check
      _
    $region3: #{tpu_custom_call.1} parent=1 // pred_check_branch
      %18 = sbr.rel (0) target = $region5
    $region4: #{tpu_custom_call.1} parent=1 // pred_region
      %s20 = ssub.s32 128, 128
      %21 = vsyncadd [#allocation3], %s20
      %s23 = sshll.u32 [#allocation2], 4
      %s24 = int_to_ptr.vmem [resolvable:$true] %s23
      %26 = dma.hbm_to_vmem [thread:$0]  %s0, 128, %s24, [#allocation3]
    $region5: #{tpu_custom_call.1} parent=1 // pred_fallthru
      _
    // Predicated region
    $region6: #{tpu_custom_call.1} parent=1 // pred_check
      _
    $region7: #{tpu_custom_call.1} parent=1 // pred_check_branch
      %28 = sbr.rel (0) target = $region9
    $region8: #{tpu_custom_call.1} parent=1 // pred_region
      %s30 = ssub.s32 384, 384
      %31 = vsyncadd [#allocation6], %s30
      %s33 = sshll.u32 [#allocation5], 4
      %s34 = int_to_ptr.vmem [resolvable:$true] %s33
      %36 = dma.hbm_to_vmem [thread:$0]  %s1, 384, %s34, [#allocation6]
    $region9: #{tpu_custom_call.1} parent=1 // pred_fallthru
      _
    // Predicated region
    $region10: #{tpu_custom_call.1} parent=1 // pred_check
      _
    $region11: #{tpu_custom_call.1} parent=1 // pred_check_branch
      %38 = sbr.rel (0) target = $region13
    $region12: #{tpu_custom_call.1} parent=1 // pred_region
      %s40 = ssub.s32 9216, 9216
      %41 = vsyncadd [#allocation6], %s40
      %s42 = sshll.u32 [#allocation7], 4
      %s43 = int_to_ptr.vmem [resolvable:$true] %s42
      %48 = dma.hbm_to_vmem [thread:$0]  %s2, 9216, %s43, [#allocation6], 192, 192, 12
    $region13: #{tpu_custom_call.1} parent=1 // pred_fallthru
      _
    // Predicated region
    $region14: #{tpu_custom_call.1} parent=1 // pred_check
      _
    $region15: #{tpu_custom_call.1} parent=1 // pred_check_branch
      %50 = sbr.rel (0) target = $region17
    $region16: #{tpu_custom_call.1} parent=1 // pred_region
      _
    $region17: #{tpu_custom_call.1} parent=1 // pred_fallthru
      _
    // Predicated region
    $region18: #{tpu_custom_call.1} parent=1 // pred_check
      _
    $region19: #{tpu_custom_call.1} parent=1 // pred_check_branch
      %52 = sbr.rel (0) target = $region21
    $region20: #{tpu_custom_call.1} parent=1 // pred_region
      %s54 = ssub.s32 9216, 9216
      %55 = vsyncadd [#allocation9], %s54
      %s56 = sshll.u32 [#allocation8], 4
      %s57 = int_to_ptr.vmem [resolvable:$true] %s56
      %62 = dma.hbm_to_vmem [thread:$0]  %s4, 9216, %s57, [#allocation9], 192, 192, 12
    $region21: #{tpu_custom_call.1} parent=1 // pred_fallthru
      _
    // Predicated region
    $region22: #{tpu_custom_call.1} parent=1 // pred_check
      _
    $region23: #{tpu_custom_call.1} parent=1 // pred_check_branch
      %64 = sbr.rel (0) target = $region25
    $region24: #{tpu_custom_call.1} parent=1 // pred_region
      _
    $region25: #{tpu_custom_call.1} parent=1 // pred_fallthru
      _
    // Predicated region
    $region26: #{tpu_custom_call.1} parent=1 // pred_check
      _
    $region27: #{tpu_custom_call.1} parent=1 // pred_check_branch
      %66 = sbr.rel (0) target = $region29
    $region28: #{tpu_custom_call.1} parent=1 // pred_region
      %s68 = ssub.s32 6144, 6144
      %69 = vsyncadd [#allocation9], %s68
      %s70 = sshll.u32 [#allocation10], 4
      %s71 = int_to_ptr.vmem [resolvable:$true] %s70
      %76 = dma.hbm_to_vmem [thread:$0]  %s6, 6144, %s71, [#allocation9], 128, 128, 8
    $region29: #{tpu_custom_call.1} parent=1 // pred_fallthru
      _
    // Predicated region
    $region30: #{tpu_custom_call.1} parent=1 // pred_check
      _
    $region31: #{tpu_custom_call.1} parent=1 // pred_check_branch
      %78 = sbr.rel (0) target = $region33
    $region32: #{tpu_custom_call.1} parent=1 // pred_region
      _
    $region33: #{tpu_custom_call.1} parent=1 // pred_fallthru
      _
    // Predicated region
    $region34: #{tpu_custom_call.1} parent=1 // pred_check
      _
    $region35: #{tpu_custom_call.1} parent=1 // pred_check_branch
      %80 = sbr.rel (0) target = $region37
    $region36: #{tpu_custom_call.1} parent=1 // pred_region
      %81 = dma.done [#allocation3], 128
    $region37: #{tpu_custom_call.1} parent=1 // pred_fallthru
      _
    // Predicated region
    $region38: #{tpu_custom_call.1} parent=1 // pred_check
      _
    $region39: #{tpu_custom_call.1} parent=1 // pred_check_branch
      %83 = sbr.rel (0) target = $region41
    $region40: #{tpu_custom_call.1} parent=1 // pred_region
      %84 = dma.done [#allocation6], 384
    $region41: #{tpu_custom_call.1} parent=1 // pred_fallthru
      _
    // Predicated region
    $region42: #{tpu_custom_call.1} parent=1 // pred_check
      _
    $region43: #{tpu_custom_call.1} parent=1 // pred_check_branch
      %86 = sbr.rel (0) target = $region45
    $region44: #{tpu_custom_call.1} parent=1 // pred_region
      %87 = dma.done [#allocation6], 9216
    $region45: #{tpu_custom_call.1} parent=1 // pred_fallthru
      _
    // Predicated region
    $region46: #{tpu_custom_call.1} parent=1 // pred_check
      _
    $region47: #{tpu_custom_call.1} parent=1 // pred_check_branch
      %89 = sbr.rel (0) target = $region49
    $region48: #{tpu_custom_call.1} parent=1 // pred_region
      %90 = dma.done [#allocation9], 9216
    $region49: #{tpu_custom_call.1} parent=1 // pred_fallthru
      _
    // Predicated region
    $region50: #{tpu_custom_call.1} parent=1 // pred_check
      _
    $region51: #{tpu_custom_call.1} parent=1 // pred_check_branch
      %92 = sbr.rel (0) target = $region53
    $region52: #{tpu_custom_call.1} parent=1 // pred_region
      %93 = dma.done [#allocation9], 6144
    $region53: #{tpu_custom_call.1} parent=1 // pred_fallthru
      _
    %v95 = vld [vmem:[#allocation2] sm:$0xff]
    %v96 = vld [vmem:[#allocation5] sm:$0xff]
    %v97 = vld [vmem:[#allocation5 + $0x8] sm:$0xff]
    %v98 = vld [vmem:[#allocation5 + $0x10] sm:$0xff]
    %vm99 = vcmask 64512
    %v101 = vsel %vm99, %v95, 0
    %103 = vmatprep.subr.mxu0 %v97
    %104 = vmatpush1.msra.mxu0 %v96
    %105 = vmatprep.subr.mxu0 0.0
    %106 = vmatpush1.msra.mxu0 0.0
    %107 = vmatprep.subr.mxu0 0.0
    %108 = vmatpush1.msra.mxu0 0.0
    %109 = vmatprep.subr.mxu0 0.0
    %110 = vmatpush1.msra.mxu0 0.0
    %111 = vmatprep.subr.mxu0 0.0
    %112 = vmatpush1.msra.mxu0 0.0
    %113 = vmatprep.subr.mxu0 0.0
    %114 = vmatpush1.msra.mxu0 0.0
    %115 = vmatprep.subr.mxu0 0.0
    %116 = vmatpush1.msra.mxu0 0.0
    %117 = vmatprep.subr.mxu0 0.0
    %118 = vmatpush1.msra.mxu0 0.0
    %119 = vmatprep.subr.mxu0 0.0
    %120 = vmatpush1.msra.mxu0 0.0
    %121 = vmatprep.subr.mxu0 0.0
    %122 = vmatpush1.msra.mxu0 0.0
    %123 = vmatprep.subr.mxu0 0.0
    %124 = vmatpush1.msra.mxu0 0.0
    %125 = vmatprep.subr.mxu0 0.0
    %126 = vmatpush1.msra.mxu0 0.0
    %127 = vmatprep.subr.mxu0 0.0
    %128 = vmatpush1.msra.mxu0 0.0
    %129 = vmatprep.subr.mxu0 0.0
    %130 = vmatpush1.msra.mxu0 0.0
    %131 = vmatprep.subr.mxu0 0.0
    %132 = vmatpush1.msra.mxu0 0.0
    %133 = vmatprep.subr.mxu0 0.0
    %134 = vmatpush1.msra.mxu0 0.0
    %135 = vmatprep.subr.mxu0 0.0
    %136 = vmatpush1.msra.mxu0 0.0
    %137 = vmatprep.subr.mxu0 0.0
    %138 = vmatpush1.msra.mxu0 0.0
    %139 = vmatprep.subr.mxu0 0.0
    %140 = vmatpush1.msra.mxu0 0.0
    %141 = vmatprep.subr.mxu0 0.0
    %142 = vmatpush1.msra.mxu0 0.0
    %143 = vmatprep.subr.mxu0 0.0
    %144 = vmatpush1.msra.mxu0 0.0
    %145 = vmatprep.subr.mxu0 0.0
    %146 = vmatpush1.msra.mxu0 0.0
    %147 = vmatprep.subr.mxu0 0.0
    %148 = vmatpush1.msra.mxu0 0.0
    %149 = vmatprep.subr.mxu0 0.0
    %150 = vmatpush1.msra.mxu0 0.0
    %151 = vmatprep.subr.mxu0 0.0
    %152 = vmatpush1.msra.mxu0 0.0
    %153 = vmatprep.subr.mxu0 0.0
    %154 = vmatpush1.msra.mxu0 0.0
    %155 = vmatprep.subr.mxu0 0.0
    %156 = vmatpush1.msra.mxu0 0.0
    %157 = vmatprep.subr.mxu0 0.0
    %158 = vmatpush1.msra.mxu0 0.0
    %159 = vmatprep.subr.mxu0 0.0
    %160 = vmatpush1.msra.mxu0 0.0
    %161 = vmatprep.subr.mxu0 0.0
    %162 = vmatpush1.msra.mxu0 0.0
    %163 = vmatprep.subr.mxu0 0.0
    %164 = vmatpush1.msra.mxu0 0.0
    %165 = vmatprep.subr.mxu0 0.0
    %166 = vmatpush1.msra.mxu0 0.0
    %167 = vmatprep.mubr.f32.mxu0 0.0
    %168 = vmatmul.mubr.f32.gmra.mrb[0].mxu0 %v101
    %v169 = vpop.f32.mrb[0].mxu0
    %v170 = vadd.f32 0.0, %v169
    %v171 = vpop.f32.mrb[0].mxu0
    %v172 = vadd.f32 0.0, %v171
    %173 = vdwg.mxu0
    %174 = vmatprep.subr.mxu0 0.0
    %175 = vmatpush1.msra.mxu0 %v98
    %176 = vmatprep.subr.mxu0 0.0
    %177 = vmatpush1.msra.mxu0 0.0
    %178 = vmatprep.subr.mxu0 0.0
    %179 = vmatpush1.msra.mxu0 0.0
    %180 = vmatprep.subr.mxu0 0.0
    %181 = vmatpush1.msra.mxu0 0.0
    %182 = vmatprep.subr.mxu0 0.0
    %183 = vmatpush1.msra.mxu0 0.0
    %184 = vmatprep.subr.mxu0 0.0
    %185 = vmatpush1.msra.mxu0 0.0
    %186 = vmatprep.subr.mxu0 0.0
    %187 = vmatpush1.msra.mxu0 0.0
    %188 = vmatprep.subr.mxu0 0.0
    %189 = vmatpush1.msra.mxu0 0.0
    %190 = vmatprep.subr.mxu0 0.0
    %191 = vmatpush1.msra.mxu0 0.0
    %192 = vmatprep.subr.mxu0 0.0
    %193 = vmatpush1.msra.mxu0 0.0
    %194 = vmatprep.subr.mxu0 0.0
    %195 = vmatpush1.msra.mxu0 0.0
    %196 = vmatprep.subr.mxu0 0.0
    %197 = vmatpush1.msra.mxu0 0.0
    %198 = vmatprep.subr.mxu0 0.0
    %199 = vmatpush1.msra.mxu0 0.0
    %200 = vmatprep.subr.mxu0 0.0
    %201 = vmatpush1.msra.mxu0 0.0
    %202 = vmatprep.subr.mxu0 0.0
    %203 = vmatpush1.msra.mxu0 0.0
    %204 = vmatprep.subr.mxu0 0.0
    %205 = vmatpush1.msra.mxu0 0.0
    %206 = vmatprep.subr.mxu0 0.0
    %207 = vmatpush1.msra.mxu0 0.0
    %208 = vmatprep.subr.mxu0 0.0
    %209 = vmatpush1.msra.mxu0 0.0
    %210 = vmatprep.subr.mxu0 0.0
    %211 = vmatpush1.msra.mxu0 0.0
    %212 = vmatprep.subr.mxu0 0.0
    %213 = vmatpush1.msra.mxu0 0.0
    %214 = vmatprep.subr.mxu0 0.0
    %215 = vmatpush1.msra.mxu0 0.0
    %216 = vmatprep.subr.mxu0 0.0
    %217 = vmatpush1.msra.mxu0 0.0
    %218 = vmatprep.subr.mxu0 0.0
    %219 = vmatpush1.msra.mxu0 0.0
    %220 = vmatprep.subr.mxu0 0.0
    %221 = vmatpush1.msra.mxu0 0.0
    %222 = vmatprep.subr.mxu0 0.0
    %223 = vmatpush1.msra.mxu0 0.0
    %224 = vmatprep.subr.mxu0 0.0
    %225 = vmatpush1.msra.mxu0 0.0
    %226 = vmatprep.subr.mxu0 0.0
    %227 = vmatpush1.msra.mxu0 0.0
    %228 = vmatprep.subr.mxu0 0.0
    %229 = vmatpush1.msra.mxu0 0.0
    %230 = vmatprep.subr.mxu0 0.0
    %231 = vmatpush1.msra.mxu0 0.0
    %232 = vmatprep.subr.mxu0 0.0
    %233 = vmatpush1.msra.mxu0 0.0
    %234 = vmatprep.subr.mxu0 0.0
    %235 = vmatpush1.msra.mxu0 0.0
    %236 = vmatprep.subr.mxu0 0.0
    %237 = vmatpush1.msra.mxu0 0.0
    %238 = vmatprep.mubr.f32.mxu0 0.0
    %239 = vmatmul.mubr.f32.gmra.mrb[0].mxu0 %v101
    %v240 = vpop.f32.mrb[0].mxu0
    %v241 = vadd.f32 0.0, %v240
    %v242 = vpop.f32.mrb[0].mxu0
    %243 = vdwg.mxu0
    %v244 = vsub.f32 0.0, %v170
    %v245 = vsub.f32 0.0, %v172
    %v246 = vsub.f32 0.0, %v241
    %v247 = vmul.f32 %v244, 1.442695
    %v248 = vpow.pop %v247
    %v249 = vmul.f32 %v245, 1.442695
    %v250 = vpow.pop %v249
    %v251 = vmul.f32 %v246, 1.442695
    %v252 = vpow.pop %v251
    %v253 = vadd.f32 %v248, 1.0
    %v254 = vadd.f32 %v250, 1.0
    %v255 = vadd.f32 %v252, 1.0
    %v256 = vrcp.pop %v253
    %v257 = vrcp.pop %v254
    %v258 = vrcp.pop %v255
    %v259 = vpack.c.bf16 %v256, %v256
    %v260 = vpack.c.bf16 %v257, %v257
    %v261 = vpack.c.bf16 %v258, %v258
    %v262 = vld [vmem:[#allocation7] sm:$0xff]
    %v263 = vld [vmem:[#allocation7 + $0x8] sm:$0xf]
    %v264 = vld [vmem:[#allocation7 + $0xc] sm:$0xff]
    %v265 = vld [vmem:[#allocation7 + $0x14] sm:$0xf]
    %v266 = vld [vmem:[#allocation7 + $0x18] sm:$0xff]
    %v267 = vld [vmem:[#allocation7 + $0x20] sm:$0xf]
    %v268 = vld [vmem:[#allocation7 + $0x24] sm:$0xff]
    %v269 = vld [vmem:[#allocation7 + $0x2c] sm:$0xf]
    %v270 = vld [vmem:[#allocation7 + $0x30] sm:$0xff]
    %v271 = vld [vmem:[#allocation7 + $0x38] sm:$0xf]
    %v272 = vld [vmem:[#allocation7 + $0x3c] sm:$0xff]
    %v273 = vld [vmem:[#allocation7 + $0x44] sm:$0xf]
    %v274 = vld [vmem:[#allocation7 + $0x48] sm:$0xff]
    %v275 = vld [vmem:[#allocation7 + $0x50] sm:$0xf]
    %v276 = vld [vmem:[#allocation7 + $0x54] sm:$0xff]
    %v277 = vld [vmem:[#allocation7 + $0x5c] sm:$0xf]
    %v278 = vld [vmem:[#allocation7 + $0x60] sm:$0xff]
    %v279 = vld [vmem:[#allocation7 + $0x68] sm:$0xf]
    %v280 = vld [vmem:[#allocation7 + $0x6c] sm:$0xff]
    %v281 = vld [vmem:[#allocation7 + $0x74] sm:$0xf]
    %v282 = vld [vmem:[#allocation7 + $0x78] sm:$0xff]
    %v283 = vld [vmem:[#allocation7 + $0x80] sm:$0xf]
    %v284 = vld [vmem:[#allocation7 + $0x84] sm:$0xff]
    %v285 = vld [vmem:[#allocation7 + $0x8c] sm:$0xf]
    %v286 = vld [vmem:[#allocation7 + $0x90] sm:$0xff]
    %v287 = vld [vmem:[#allocation7 + $0x98] sm:$0xf]
    %v288 = vld [vmem:[#allocation7 + $0x9c] sm:$0xff]
    %v289 = vld [vmem:[#allocation7 + $0xa4] sm:$0xf]
    %v290 = vld [vmem:[#allocation7 + $0xa8] sm:$0xff]
    %v291 = vld [vmem:[#allocation7 + $0xb0] sm:$0xf]
    %v292 = vld [vmem:[#allocation7 + $0xb4] sm:$0xff]
    %v293 = vld [vmem:[#allocation7 + $0xbc] sm:$0xf]
    %v294 = vld [vmem:[#allocation7 + $0xc0] sm:$0xff]
    %v295 = vld [vmem:[#allocation7 + $0xc8] sm:$0xf]
    %v296 = vld [vmem:[#allocation7 + $0xcc] sm:$0xff]
    %v297 = vld [vmem:[#allocation7 + $0xd4] sm:$0xf]
    %v298 = vld [vmem:[#allocation7 + $0xd8] sm:$0xff]
    %v299 = vld [vmem:[#allocation7 + $0xe0] sm:$0xf]
    %v300 = vld [vmem:[#allocation7 + $0xe4] sm:$0xff]
    %v301 = vld [vmem:[#allocation7 + $0xec] sm:$0xf]
    %v302 = vld [vmem:[#allocation7 + $0xf0] sm:$0xff]
    %v303 = vld [vmem:[#allocation7 + $0xf8] sm:$0xf]
    %v304 = vld [vmem:[#allocation7 + $0xfc] sm:$0xff]
    %v305 = vld [vmem:[#allocation7 + $0x104] sm:$0xf]
    %v306 = vld [vmem:[#allocation7 + $0x108] sm:$0xff]
    %v307 = vld [vmem:[#allocation7 + $0x110] sm:$0xf]
    %v308 = vld [vmem:[#allocation7 + $0x114] sm:$0xff]
    %v309 = vld [vmem:[#allocation7 + $0x11c] sm:$0xf]
    %v310 = vld [vmem:[#allocation7 + $0x120] sm:$0xff]
    %v311 = vld [vmem:[#allocation7 + $0x128] sm:$0xf]
    %v312 = vld [vmem:[#allocation7 + $0x12c] sm:$0xff]
    %v313 = vld [vmem:[#allocation7 + $0x134] sm:$0xf]
    %v314 = vld [vmem:[#allocation7 + $0x138] sm:$0xff]
    %v315 = vld [vmem:[#allocation7 + $0x140] sm:$0xf]
    %v316 = vld [vmem:[#allocation7 + $0x144] sm:$0xff]
    %v317 = vld [vmem:[#allocation7 + $0x14c] sm:$0xf]
    %v318 = vld [vmem:[#allocation7 + $0x150] sm:$0xff]
    %v319 = vld [vmem:[#allocation7 + $0x158] sm:$0xf]
    %v320 = vld [vmem:[#allocation7 + $0x15c] sm:$0xff]
    %v321 = vld [vmem:[#allocation7 + $0x164] sm:$0xf]
    %v322 = vld [vmem:[#allocation7 + $0x168] sm:$0xff]
    %v323 = vld [vmem:[#allocation7 + $0x170] sm:$0xf]
    %v324 = vld [vmem:[#allocation7 + $0x174] sm:$0xff]
    %v325 = vld [vmem:[#allocation7 + $0x17c] sm:$0xf]
    %v326 = vld [vmem:[#allocation7 + $0x180] sm:$0xff]
    %v327 = vld [vmem:[#allocation7 + $0x188] sm:$0xf]
    %v328 = vld [vmem:[#allocation7 + $0x18c] sm:$0xff]
    %v329 = vld [vmem:[#allocation7 + $0x194] sm:$0xf]
    %v330 = vld [vmem:[#allocation7 + $0x198] sm:$0xff]
    %v331 = vld [vmem:[#allocation7 + $0x1a0] sm:$0xf]
    %v332 = vld [vmem:[#allocation7 + $0x1a4] sm:$0xff]
    %v333 = vld [vmem:[#allocation7 + $0x1ac] sm:$0xf]
    %v334 = vld [vmem:[#allocation7 + $0x1b0] sm:$0xff]
    %v335 = vld [vmem:[#allocation7 + $0x1b8] sm:$0xf]
    %v336 = vld [vmem:[#allocation7 + $0x1bc] sm:$0xff]
    %v337 = vld [vmem:[#allocation7 + $0x1c4] sm:$0xf]
    %v338 = vld [vmem:[#allocation7 + $0x1c8] sm:$0xff]
    %v339 = vld [vmem:[#allocation7 + $0x1d0] sm:$0xf]
    %v340 = vld [vmem:[#allocation7 + $0x1d4] sm:$0xff]
    %v341 = vld [vmem:[#allocation7 + $0x1dc] sm:$0xf]
    %v342 = vld [vmem:[#allocation7 + $0x1e0] sm:$0xff]
    %v343 = vld [vmem:[#allocation7 + $0x1e8] sm:$0xf]
    %v344 = vld [vmem:[#allocation7 + $0x1ec] sm:$0xff]
    %v345 = vld [vmem:[#allocation7 + $0x1f4] sm:$0xf]
    %v346 = vld [vmem:[#allocation7 + $0x1f8] sm:$0xff]
    %v347 = vld [vmem:[#allocation7 + $0x200] sm:$0xf]
    %v348 = vld [vmem:[#allocation7 + $0x204] sm:$0xff]
    %v349 = vld [vmem:[#allocation7 + $0x20c] sm:$0xf]
    %v350 = vld [vmem:[#allocation7 + $0x210] sm:$0xff]
    %v351 = vld [vmem:[#allocation7 + $0x218] sm:$0xf]
    %v352 = vld [vmem:[#allocation7 + $0x21c] sm:$0xff]
    %v353 = vld [vmem:[#allocation7 + $0x224] sm:$0xf]
    %v354 = vld [vmem:[#allocation7 + $0x228] sm:$0xff]
    %v355 = vld [vmem:[#allocation7 + $0x230] sm:$0xf]
    %v356 = vld [vmem:[#allocation7 + $0x234] sm:$0xff]
    %v357 = vld [vmem:[#allocation7 + $0x23c] sm:$0xf]
    %v358 = vld [vmem:[%s3] sm:$0x7]
    %v360 = vlaneseq
    %v361 = vshrl.u32 %v360, 7
    %v362 = vsub.s32 0, %v361
    %v363 = vrot.slane %v358, %v362
    %v364 = vlaneseq
    %v365 = vshrl.u32 %v364, 7
    %v366 = vsub.s32 1, %v365
    %v367 = vrot.slane %v358, %v366
    %v368 = vlaneseq
    %v369 = vshrl.u32 %v368, 7
    %v370 = vsub.s32 2, %v369
    %v371 = vrot.slane %v358, %v370
    %v471 = vunpack.c.l.b16 %v262
    %v472 = vunpack.c.h.b16 %v262
    %v473 = vunpack.c.l.b16 %v263
    %v474 = vunpack.c.l.b16 %v264
    %v475 = vunpack.c.h.b16 %v264
    %v476 = vunpack.c.l.b16 %v265
    %v477 = vunpack.c.l.b16 %v266
    %v478 = vunpack.c.h.b16 %v266
    %v479 = vunpack.c.l.b16 %v267
    %v480 = vunpack.c.l.b16 %v268
    %v481 = vunpack.c.h.b16 %v268
    %v482 = vunpack.c.l.b16 %v269
    %v483 = vunpack.c.l.b16 %v270
    %v484 = vunpack.c.h.b16 %v270
    %v485 = vunpack.c.l.b16 %v271
    %v486 = vunpack.c.l.b16 %v272
    %v487 = vunpack.c.h.b16 %v272
    %v488 = vunpack.c.l.b16 %v273
    %v489 = vunpack.c.l.b16 %v274
    %v490 = vunpack.c.h.b16 %v274
    %v491 = vunpack.c.l.b16 %v275
    %v492 = vunpack.c.l.b16 %v276
    %v493 = vunpack.c.h.b16 %v276
    %v494 = vunpack.c.l.b16 %v277
    %v495 = vunpack.c.l.b16 %v278
    %v496 = vunpack.c.h.b16 %v278
    %v497 = vunpack.c.l.b16 %v279
    %v498 = vunpack.c.l.b16 %v280
    %v499 = vunpack.c.h.b16 %v280
    %v500 = vunpack.c.l.b16 %v281
    %v501 = vunpack.c.l.b16 %v282
    %v502 = vunpack.c.h.b16 %v282
    %v503 = vunpack.c.l.b16 %v283
    %v504 = vunpack.c.l.b16 %v284
    %v505 = vunpack.c.h.b16 %v284
    %v506 = vunpack.c.l.b16 %v285
    %v507 = vunpack.c.l.b16 %v286
    %v508 = vunpack.c.h.b16 %v286
    %v509 = vunpack.c.l.b16 %v287
    %v510 = vunpack.c.l.b16 %v288
    %v511 = vunpack.c.h.b16 %v288
    %v512 = vunpack.c.l.b16 %v289
    %v513 = vunpack.c.l.b16 %v290
    %v514 = vunpack.c.h.b16 %v290
    %v515 = vunpack.c.l.b16 %v291
    %v516 = vunpack.c.l.b16 %v292
    %v517 = vunpack.c.h.b16 %v292
    %v518 = vunpack.c.l.b16 %v293
    %v519 = vunpack.c.l.b16 %v294
    %v520 = vunpack.c.h.b16 %v294
    %v521 = vunpack.c.l.b16 %v295
    %v522 = vunpack.c.l.b16 %v296
    %v523 = vunpack.c.h.b16 %v296
    %v524 = vunpack.c.l.b16 %v297
    %v525 = vunpack.c.l.b16 %v298
    %v526 = vunpack.c.h.b16 %v298
    %v527 = vunpack.c.l.b16 %v299
    %v528 = vunpack.c.l.b16 %v300
    %v529 = vunpack.c.h.b16 %v300
    %v530 = vunpack.c.l.b16 %v301
    %v531 = vunpack.c.l.b16 %v302
    %v532 = vunpack.c.h.b16 %v302
    %v533 = vunpack.c.l.b16 %v303
    %v534 = vunpack.c.l.b16 %v304
    %v535 = vunpack.c.h.b16 %v304
    %v536 = vunpack.c.l.b16 %v305
    %v537 = vunpack.c.l.b16 %v306
    %v538 = vunpack.c.h.b16 %v306
    %v539 = vunpack.c.l.b16 %v307
    %v540 = vunpack.c.l.b16 %v308
    %v541 = vunpack.c.h.b16 %v308
    %v542 = vunpack.c.l.b16 %v309
    %v543 = vunpack.c.l.b16 %v310
    %v544 = vunpack.c.h.b16 %v310
    %v545 = vunpack.c.l.b16 %v311
    %v546 = vunpack.c.l.b16 %v312
    %v547 = vunpack.c.h.b16 %v312
    %v548 = vunpack.c.l.b16 %v313
    %v549 = vunpack.c.l.b16 %v314
    %v550 = vunpack.c.h.b16 %v314
    %v551 = vunpack.c.l.b16 %v315
    %v552 = vunpack.c.l.b16 %v316
    %v553 = vunpack.c.h.b16 %v316
    %v554 = vunpack.c.l.b16 %v317
    %v555 = vunpack.c.l.b16 %v318
    %v556 = vunpack.c.h.b16 %v318
    %v557 = vunpack.c.l.b16 %v319
    %v558 = vunpack.c.l.b16 %v320
    %v559 = vunpack.c.h.b16 %v320
    %v560 = vunpack.c.l.b16 %v321
    %v561 = vunpack.c.l.b16 %v322
    %v562 = vunpack.c.h.b16 %v322
    %v563 = vunpack.c.l.b16 %v323
    %v564 = vunpack.c.l.b16 %v324
    %v565 = vunpack.c.h.b16 %v324
    %v566 = vunpack.c.l.b16 %v325
    %v567 = vunpack.c.l.b16 %v326
    %v568 = vunpack.c.h.b16 %v326
    %v569 = vunpack.c.l.b16 %v327
    %v570 = vunpack.c.l.b16 %v328
    %v571 = vunpack.c.h.b16 %v328
    %v572 = vunpack.c.l.b16 %v329
    %v573 = vunpack.c.l.b16 %v330
    %v574 = vunpack.c.h.b16 %v330
    %v575 = vunpack.c.l.b16 %v331
    %v576 = vunpack.c.l.b16 %v332
    %v577 = vunpack.c.h.b16 %v332
    %v578 = vunpack.c.l.b16 %v333
    %v579 = vunpack.c.l.b16 %v334
    %v580 = vunpack.c.h.b16 %v334
    %v581 = vunpack.c.l.b16 %v335
    %v582 = vunpack.c.l.b16 %v336
    %v583 = vunpack.c.h.b16 %v336
    %v584 = vunpack.c.l.b16 %v337
    %v585 = vunpack.c.l.b16 %v338
    %v586 = vunpack.c.h.b16 %v338
    %v587 = vunpack.c.l.b16 %v339
    %v588 = vunpack.c.l.b16 %v340
    %v589 = vunpack.c.h.b16 %v340
    %v590 = vunpack.c.l.b16 %v341
    %v591 = vunpack.c.l.b16 %v342
    %v592 = vunpack.c.h.b16 %v342
    %v593 = vunpack.c.l.b16 %v343
    %v594 = vunpack.c.l.b16 %v344
    %v595 = vunpack.c.h.b16 %v344
    %v596 = vunpack.c.l.b16 %v345
    %v597 = vunpack.c.l.b16 %v346
    %v598 = vunpack.c.h.b16 %v346
    %v599 = vunpack.c.l.b16 %v347
    %v600 = vunpack.c.l.b16 %v348
    %v601 = vunpack.c.h.b16 %v348
    %v602 = vunpack.c.l.b16 %v349
    %v603 = vunpack.c.l.b16 %v350
    %v604 = vunpack.c.h.b16 %v350
    %v605 = vunpack.c.l.b16 %v351
    %v606 = vunpack.c.l.b16 %v352
    %v607 = vunpack.c.h.b16 %v352
    %v608 = vunpack.c.l.b16 %v353
    %v609 = vunpack.c.l.b16 %v354
    %v610 = vunpack.c.h.b16 %v354
    %v611 = vunpack.c.l.b16 %v355
    %v612 = vunpack.c.l.b16 %v356
    %v613 = vunpack.c.h.b16 %v356
    %v614 = vunpack.c.l.b16 %v357
    %v615 = vpack.c.b16 %v474, %v471
    %v616 = vpack.c.b16 %v475, %v472
    %v617 = vpack.c.b16 %v476, %v473
    %v618 = vpack.c.b16 %v480, %v477
    %v619 = vpack.c.b16 %v481, %v478
    %v620 = vpack.c.b16 %v482, %v479
    %v621 = vpack.c.b16 %v486, %v483
    %v622 = vpack.c.b16 %v487, %v484
    %v623 = vpack.c.b16 %v488, %v485
    %v624 = vpack.c.b16 %v492, %v489
    %v625 = vpack.c.b16 %v493, %v490
    %v626 = vpack.c.b16 %v494, %v491
    %v627 = vpack.c.b16 %v498, %v495
    %v628 = vpack.c.b16 %v499, %v496
    %v629 = vpack.c.b16 %v500, %v497
    %v630 = vpack.c.b16 %v504, %v501
    %v631 = vpack.c.b16 %v505, %v502
    %v632 = vpack.c.b16 %v506, %v503
    %v633 = vpack.c.b16 %v510, %v507
    %v634 = vpack.c.b16 %v511, %v508
    %v635 = vpack.c.b16 %v512, %v509
    %v636 = vpack.c.b16 %v516, %v513
    %v637 = vpack.c.b16 %v517, %v514
    %v638 = vpack.c.b16 %v518, %v515
    %v639 = vpack.c.b16 %v522, %v519
    %v640 = vpack.c.b16 %v523, %v520
    %v641 = vpack.c.b16 %v524, %v521
    %v642 = vpack.c.b16 %v528, %v525
    %v643 = vpack.c.b16 %v529, %v526
    %v644 = vpack.c.b16 %v530, %v527
    %v645 = vpack.c.b16 %v534, %v531
    %v646 = vpack.c.b16 %v535, %v532
    %v647 = vpack.c.b16 %v536, %v533
    %v648 = vpack.c.b16 %v540, %v537
    %v649 = vpack.c.b16 %v541, %v538
    %v650 = vpack.c.b16 %v542, %v539
    %v651 = vpack.c.b16 %v546, %v543
    %v652 = vpack.c.b16 %v547, %v544
    %v653 = vpack.c.b16 %v548, %v545
    %v654 = vpack.c.b16 %v552, %v549
    %v655 = vpack.c.b16 %v553, %v550
    %v656 = vpack.c.b16 %v554, %v551
    %v657 = vpack.c.b16 %v558, %v555
    %v658 = vpack.c.b16 %v559, %v556
    %v659 = vpack.c.b16 %v560, %v557
    %v660 = vpack.c.b16 %v564, %v561
    %v661 = vpack.c.b16 %v565, %v562
    %v662 = vpack.c.b16 %v566, %v563
    %v663 = vpack.c.b16 %v570, %v567
    %v664 = vpack.c.b16 %v571, %v568
    %v665 = vpack.c.b16 %v572, %v569
    %v666 = vpack.c.b16 %v576, %v573
    %v667 = vpack.c.b16 %v577, %v574
    %v668 = vpack.c.b16 %v578, %v575
    %v669 = vpack.c.b16 %v582, %v579
    %v670 = vpack.c.b16 %v583, %v580
    %v671 = vpack.c.b16 %v584, %v581
    %v672 = vpack.c.b16 %v588, %v585
    %v673 = vpack.c.b16 %v589, %v586
    %v674 = vpack.c.b16 %v590, %v587
    %v675 = vpack.c.b16 %v594, %v591
    %v676 = vpack.c.b16 %v595, %v592
    %v677 = vpack.c.b16 %v596, %v593
    %v678 = vpack.c.b16 %v600, %v597
    %v679 = vpack.c.b16 %v601, %v598
    %v680 = vpack.c.b16 %v602, %v599
    %v681 = vpack.c.b16 %v606, %v603
    %v682 = vpack.c.b16 %v607, %v604
    %v683 = vpack.c.b16 %v608, %v605
    %v684 = vpack.c.b16 %v612, %v609
    %v685 = vpack.c.b16 %v613, %v610
    %v686 = vpack.c.b16 %v614, %v611
    %759 = vmatprep.subr.bf16.mxu0 %v616
    %760 = vmatpush1.bf16.msra.mxu0 %v615
    %761 = vmatprep.subr.bf16.mxu0 %v619
    %762 = vmatpush1.bf16.msra.mxu0 %v618
    %763 = vmatprep.subr.bf16.mxu0 %v622
    %764 = vmatpush1.bf16.msra.mxu0 %v621
    %765 = vmatprep.subr.bf16.mxu0 %v625
    %766 = vmatpush1.bf16.msra.mxu0 %v624
    %767 = vmatprep.subr.bf16.mxu0 %v628
    %768 = vmatpush1.bf16.msra.mxu0 %v627
    %769 = vmatprep.subr.bf16.mxu0 %v631
    %770 = vmatpush1.bf16.msra.mxu0 %v630
    %771 = vmatprep.subr.bf16.mxu0 %v634
    %772 = vmatpush1.bf16.msra.mxu0 %v633
    %773 = vmatprep.subr.bf16.mxu0 %v637
    %774 = vmatpush1.bf16.msra.mxu0 %v636
    %775 = vmatprep.subr.bf16.mxu0 %v640
    %776 = vmatpush1.bf16.msra.mxu0 %v639
    %777 = vmatprep.subr.bf16.mxu0 %v643
    %778 = vmatpush1.bf16.msra.mxu0 %v642
    %779 = vmatprep.subr.bf16.mxu0 %v646
    %780 = vmatpush1.bf16.msra.mxu0 %v645
    %781 = vmatprep.subr.bf16.mxu0 %v649
    %782 = vmatpush1.bf16.msra.mxu0 %v648
    %783 = vmatprep.subr.bf16.mxu0 %v652
    %784 = vmatpush1.bf16.msra.mxu0 %v651
    %785 = vmatprep.subr.bf16.mxu0 %v655
    %786 = vmatpush1.bf16.msra.mxu0 %v654
    %787 = vmatprep.subr.bf16.mxu0 %v658
    %788 = vmatpush1.bf16.msra.mxu0 %v657
    %789 = vmatprep.subr.bf16.mxu0 %v661
    %790 = vmatpush1.bf16.msra.mxu0 %v660
    %791 = vmatprep.mubr.bf16.mxu0 %v260
    %792 = vmatmul.mubr.bf16.gmra.mrb[0].mxu0 %v259
    %v793 = vpop.f32.mrb[0].mxu0
    %v794 = vadd.f32 %v363, %v793
    %v795 = vpop.f32.mrb[0].mxu0
    %v796 = vadd.f32 %v367, %v795
    %v797 = vpop.f32.mrb[0].mxu0
    %v798 = vpop.f32.mrb[0].mxu0
    %799 = vdwg.mxu0
    %800 = vmatprep.subr.bf16.mxu0 %v664
    %801 = vmatpush1.bf16.msra.mxu0 %v663
    %802 = vmatprep.subr.bf16.mxu0 %v667
    %803 = vmatpush1.bf16.msra.mxu0 %v666
    %804 = vmatprep.subr.bf16.mxu0 %v670
    %805 = vmatpush1.bf16.msra.mxu0 %v669
    %806 = vmatprep.subr.bf16.mxu0 %v673
    %807 = vmatpush1.bf16.msra.mxu0 %v672
    %808 = vmatprep.subr.bf16.mxu0 %v676
    %809 = vmatpush1.bf16.msra.mxu0 %v675
    %810 = vmatprep.subr.bf16.mxu0 %v679
    %811 = vmatpush1.bf16.msra.mxu0 %v678
    %812 = vmatprep.subr.bf16.mxu0 %v682
    %813 = vmatpush1.bf16.msra.mxu0 %v681
    %814 = vmatprep.subr.bf16.mxu0 %v685
    %815 = vmatpush1.bf16.msra.mxu0 %v684
    %816 = vmatprep.subr.bf16.mxu0 0
    %817 = vmatpush1.bf16.msra.mxu0 0
    %818 = vmatprep.subr.bf16.mxu0 0
    %819 = vmatpush1.bf16.msra.mxu0 0
    %820 = vmatprep.subr.bf16.mxu0 0
    %821 = vmatpush1.bf16.msra.mxu0 0
    %822 = vmatprep.subr.bf16.mxu0 0
    %823 = vmatpush1.bf16.msra.mxu0 0
    %824 = vmatprep.subr.bf16.mxu0 0
    %825 = vmatpush1.bf16.msra.mxu0 0
    %826 = vmatprep.subr.bf16.mxu0 0
    %827 = vmatpush1.bf16.msra.mxu0 0
    %828 = vmatprep.subr.bf16.mxu0 0
    %829 = vmatpush1.bf16.msra.mxu0 0
    %830 = vmatprep.subr.bf16.mxu0 0
    %831 = vmatpush1.bf16.msra.mxu0 0
    %832 = vmatprep.mubr.bf16.mxu0 0
    %833 = vmatmul.mubr.bf16.gmra.mrb[0].mxu0 %v261
    %v834 = vpop.f32.mrb[0].mxu0
    %v835 = vadd.f32 %v794, %v834
    %v836 = vpop.f32.mrb[0].mxu0
    %v837 = vadd.f32 %v796, %v836
    %v838 = vpop.f32.mrb[0].mxu0
    %v839 = vpop.f32.mrb[0].mxu0
    %840 = vdwg.mxu0
    %841 = vmatprep.subr.bf16.mxu0 0
    %842 = vmatpush1.bf16.msra.mxu0 %v617
    %843 = vmatprep.subr.bf16.mxu0 0
    %844 = vmatpush1.bf16.msra.mxu0 %v620
    %845 = vmatprep.subr.bf16.mxu0 0
    %846 = vmatpush1.bf16.msra.mxu0 %v623
    %847 = vmatprep.subr.bf16.mxu0 0
    %848 = vmatpush1.bf16.msra.mxu0 %v626
    %849 = vmatprep.subr.bf16.mxu0 0
    %850 = vmatpush1.bf16.msra.mxu0 %v629
    %851 = vmatprep.subr.bf16.mxu0 0
    %852 = vmatpush1.bf16.msra.mxu0 %v632
    %853 = vmatprep.subr.bf16.mxu0 0
    %854 = vmatpush1.bf16.msra.mxu0 %v635
    %855 = vmatprep.subr.bf16.mxu0 0
    %856 = vmatpush1.bf16.msra.mxu0 %v638
    %857 = vmatprep.subr.bf16.mxu0 0
    %858 = vmatpush1.bf16.msra.mxu0 %v641
    %859 = vmatprep.subr.bf16.mxu0 0
    %860 = vmatpush1.bf16.msra.mxu0 %v644
    %861 = vmatprep.subr.bf16.mxu0 0
    %862 = vmatpush1.bf16.msra.mxu0 %v647
    %863 = vmatprep.subr.bf16.mxu0 0
    %864 = vmatpush1.bf16.msra.mxu0 %v650
    %865 = vmatprep.subr.bf16.mxu0 0
    %866 = vmatpush1.bf16.msra.mxu0 %v653
    %867 = vmatprep.subr.bf16.mxu0 0
    %868 = vmatpush1.bf16.msra.mxu0 %v656
    %869 = vmatprep.subr.bf16.mxu0 0
    %870 = vmatpush1.bf16.msra.mxu0 %v659
    %871 = vmatprep.subr.bf16.mxu0 0
    %872 = vmatpush1.bf16.msra.mxu0 %v662
    %873 = vmatprep.mubr.bf16.mxu0 %v260
    %874 = vmatmul.mubr.bf16.gmra.mrb[0].mxu0 %v259
    %v875 = vpop.f32.mrb[0].mxu0
    %v876 = vadd.f32 %v371, %v875
    %v877 = vpop.f32.mrb[0].mxu0
    %v878 = vpop.f32.mrb[0].mxu0
    %v879 = vpop.f32.mrb[0].mxu0
    %880 = vdwg.mxu0
    %881 = vmatprep.subr.bf16.mxu0 0
    %882 = vmatpush1.bf16.msra.mxu0 %v665
    %883 = vmatprep.subr.bf16.mxu0 0
    %884 = vmatpush1.bf16.msra.mxu0 %v668
    %885 = vmatprep.subr.bf16.mxu0 0
    %886 = vmatpush1.bf16.msra.mxu0 %v671
    %887 = vmatprep.subr.bf16.mxu0 0
    %888 = vmatpush1.bf16.msra.mxu0 %v674
    %889 = vmatprep.subr.bf16.mxu0 0
    %890 = vmatpush1.bf16.msra.mxu0 %v677
    %891 = vmatprep.subr.bf16.mxu0 0
    %892 = vmatpush1.bf16.msra.mxu0 %v680
    %893 = vmatprep.subr.bf16.mxu0 0
    %894 = vmatpush1.bf16.msra.mxu0 %v683
    %895 = vmatprep.subr.bf16.mxu0 0
    %896 = vmatpush1.bf16.msra.mxu0 %v686
    %897 = vmatprep.subr.bf16.mxu0 0
    %898 = vmatpush1.bf16.msra.mxu0 0
    %899 = vmatprep.subr.bf16.mxu0 0
    %900 = vmatpush1.bf16.msra.mxu0 0
    %901 = vmatprep.subr.bf16.mxu0 0
    %902 = vmatpush1.bf16.msra.mxu0 0
    %903 = vmatprep.subr.bf16.mxu0 0
    %904 = vmatpush1.bf16.msra.mxu0 0
    %905 = vmatprep.subr.bf16.mxu0 0
    %906 = vmatpush1.bf16.msra.mxu0 0
    %907 = vmatprep.subr.bf16.mxu0 0
    %908 = vmatpush1.bf16.msra.mxu0 0
    %909 = vmatprep.subr.bf16.mxu0 0
    %910 = vmatpush1.bf16.msra.mxu0 0
    %911 = vmatprep.subr.bf16.mxu0 0
    %912 = vmatpush1.bf16.msra.mxu0 0
    %913 = vmatprep.mubr.bf16.mxu0 0
    %914 = vmatmul.mubr.bf16.gmra.mrb[0].mxu0 %v261
    %v915 = vpop.f32.mrb[0].mxu0
    %v916 = vadd.f32 %v876, %v915
    %v917 = vpop.f32.mrb[0].mxu0
    %v918 = vpop.f32.mrb[0].mxu0
    %v919 = vpop.f32.mrb[0].mxu0
    %920 = vdwg.mxu0
    %v921 = vsub.f32 0.0, %v835
    %v922 = vsub.f32 0.0, %v837
    %v923 = vsub.f32 0.0, %v916
    %v924 = vmul.f32 %v921, 1.442695
    %v925 = vpow.pop %v924
    %v926 = vmul.f32 %v922, 1.442695
    %v927 = vpow.pop %v926
    %v928 = vmul.f32 %v923, 1.442695
    %v929 = vpow.pop %v928
    %v930 = vadd.f32 %v925, 1.0
    %v931 = vadd.f32 %v927, 1.0
    %v932 = vadd.f32 %v929, 1.0
    %v933 = vrcp.pop %v930
    %v934 = vrcp.pop %v931
    %v935 = vrcp.pop %v932
    %v936 = vpack.c.bf16 %v933, %v933
    %v937 = vpack.c.bf16 %v934, %v934
    %v938 = vpack.c.bf16 %v935, %v935
    %v939 = vld [vmem:[#allocation8] sm:$0xff]
    %v940 = vld [vmem:[#allocation8 + $0x8] sm:$0xf]
    %v941 = vld [vmem:[#allocation8 + $0xc] sm:$0xff]
    %v942 = vld [vmem:[#allocation8 + $0x14] sm:$0xf]
    %v943 = vld [vmem:[#allocation8 + $0x18] sm:$0xff]
    %v944 = vld [vmem:[#allocation8 + $0x20] sm:$0xf]
    %v945 = vld [vmem:[#allocation8 + $0x24] sm:$0xff]
    %v946 = vld [vmem:[#allocation8 + $0x2c] sm:$0xf]
    %v947 = vld [vmem:[#allocation8 + $0x30] sm:$0xff]
    %v948 = vld [vmem:[#allocation8 + $0x38] sm:$0xf]
    %v949 = vld [vmem:[#allocation8 + $0x3c] sm:$0xff]
    %v950 = vld [vmem:[#allocation8 + $0x44] sm:$0xf]
    %v951 = vld [vmem:[#allocation8 + $0x48] sm:$0xff]
    %v952 = vld [vmem:[#allocation8 + $0x50] sm:$0xf]
    %v953 = vld [vmem:[#allocation8 + $0x54] sm:$0xff]
    %v954 = vld [vmem:[#allocation8 + $0x5c] sm:$0xf]
    %v955 = vld [vmem:[#allocation8 + $0x60] sm:$0xff]
    %v956 = vld [vmem:[#allocation8 + $0x68] sm:$0xf]
    %v957 = vld [vmem:[#allocation8 + $0x6c] sm:$0xff]
    %v958 = vld [vmem:[#allocation8 + $0x74] sm:$0xf]
    %v959 = vld [vmem:[#allocation8 + $0x78] sm:$0xff]
    %v960 = vld [vmem:[#allocation8 + $0x80] sm:$0xf]
    %v961 = vld [vmem:[#allocation8 + $0x84] sm:$0xff]
    %v962 = vld [vmem:[#allocation8 + $0x8c] sm:$0xf]
    %v963 = vld [vmem:[#allocation8 + $0x90] sm:$0xff]
    %v964 = vld [vmem:[#allocation8 + $0x98] sm:$0xf]
    %v965 = vld [vmem:[#allocation8 + $0x9c] sm:$0xff]
    %v966 = vld [vmem:[#allocation8 + $0xa4] sm:$0xf]
    %v967 = vld [vmem:[#allocation8 + $0xa8] sm:$0xff]
    %v968 = vld [vmem:[#allocation8 + $0xb0] sm:$0xf]
    %v969 = vld [vmem:[#allocation8 + $0xb4] sm:$0xff]
    %v970 = vld [vmem:[#allocation8 + $0xbc] sm:$0xf]
    %v971 = vld [vmem:[#allocation8 + $0xc0] sm:$0xff]
    %v972 = vld [vmem:[#allocation8 + $0xc8] sm:$0xf]
    %v973 = vld [vmem:[#allocation8 + $0xcc] sm:$0xff]
    %v974 = vld [vmem:[#allocation8 + $0xd4] sm:$0xf]
    %v975 = vld [vmem:[#allocation8 + $0xd8] sm:$0xff]
    %v976 = vld [vmem:[#allocation8 + $0xe0] sm:$0xf]
    %v977 = vld [vmem:[#allocation8 + $0xe4] sm:$0xff]
    %v978 = vld [vmem:[#allocation8 + $0xec] sm:$0xf]
    %v979 = vld [vmem:[#allocation8 + $0xf0] sm:$0xff]
    %v980 = vld [vmem:[#allocation8 + $0xf8] sm:$0xf]
    %v981 = vld [vmem:[#allocation8 + $0xfc] sm:$0xff]
    %v982 = vld [vmem:[#allocation8 + $0x104] sm:$0xf]
    %v983 = vld [vmem:[#allocation8 + $0x108] sm:$0xff]
    %v984 = vld [vmem:[#allocation8 + $0x110] sm:$0xf]
    %v985 = vld [vmem:[#allocation8 + $0x114] sm:$0xff]
    %v986 = vld [vmem:[#allocation8 + $0x11c] sm:$0xf]
    %v987 = vld [vmem:[#allocation8 + $0x120] sm:$0xff]
    %v988 = vld [vmem:[#allocation8 + $0x128] sm:$0xf]
    %v989 = vld [vmem:[#allocation8 + $0x12c] sm:$0xff]
    %v990 = vld [vmem:[#allocation8 + $0x134] sm:$0xf]
    %v991 = vld [vmem:[#allocation8 + $0x138] sm:$0xff]
    %v992 = vld [vmem:[#allocation8 + $0x140] sm:$0xf]
    %v993 = vld [vmem:[#allocation8 + $0x144] sm:$0xff]
    %v994 = vld [vmem:[#allocation8 + $0x14c] sm:$0xf]
    %v995 = vld [vmem:[#allocation8 + $0x150] sm:$0xff]
    %v996 = vld [vmem:[#allocation8 + $0x158] sm:$0xf]
    %v997 = vld [vmem:[#allocation8 + $0x15c] sm:$0xff]
    %v998 = vld [vmem:[#allocation8 + $0x164] sm:$0xf]
    %v999 = vld [vmem:[#allocation8 + $0x168] sm:$0xff]
    %v1000 = vld [vmem:[#allocation8 + $0x170] sm:$0xf]
    %v1001 = vld [vmem:[#allocation8 + $0x174] sm:$0xff]
    %v1002 = vld [vmem:[#allocation8 + $0x17c] sm:$0xf]
    %v1003 = vld [vmem:[#allocation8 + $0x180] sm:$0xff]
    %v1004 = vld [vmem:[#allocation8 + $0x188] sm:$0xf]
    %v1005 = vld [vmem:[#allocation8 + $0x18c] sm:$0xff]
    %v1006 = vld [vmem:[#allocation8 + $0x194] sm:$0xf]
    %v1007 = vld [vmem:[#allocation8 + $0x198] sm:$0xff]
    %v1008 = vld [vmem:[#allocation8 + $0x1a0] sm:$0xf]
    %v1009 = vld [vmem:[#allocation8 + $0x1a4] sm:$0xff]
    %v1010 = vld [vmem:[#allocation8 + $0x1ac] sm:$0xf]
    %v1011 = vld [vmem:[#allocation8 + $0x1b0] sm:$0xff]
    %v1012 = vld [vmem:[#allocation8 + $0x1b8] sm:$0xf]
    %v1013 = vld [vmem:[#allocation8 + $0x1bc] sm:$0xff]
    %v1014 = vld [vmem:[#allocation8 + $0x1c4] sm:$0xf]
    %v1015 = vld [vmem:[#allocation8 + $0x1c8] sm:$0xff]
    %v1016 = vld [vmem:[#allocation8 + $0x1d0] sm:$0xf]
    %v1017 = vld [vmem:[#allocation8 + $0x1d4] sm:$0xff]
    %v1018 = vld [vmem:[#allocation8 + $0x1dc] sm:$0xf]
    %v1019 = vld [vmem:[#allocation8 + $0x1e0] sm:$0xff]
    %v1020 = vld [vmem:[#allocation8 + $0x1e8] sm:$0xf]
    %v1021 = vld [vmem:[#allocation8 + $0x1ec] sm:$0xff]
    %v1022 = vld [vmem:[#allocation8 + $0x1f4] sm:$0xf]
    %v1023 = vld [vmem:[#allocation8 + $0x1f8] sm:$0xff]
    %v1024 = vld [vmem:[#allocation8 + $0x200] sm:$0xf]
    %v1025 = vld [vmem:[#allocation8 + $0x204] sm:$0xff]
    %v1026 = vld [vmem:[#allocation8 + $0x20c] sm:$0xf]
    %v1027 = vld [vmem:[#allocation8 + $0x210] sm:$0xff]
    %v1028 = vld [vmem:[#allocation8 + $0x218] sm:$0xf]
    %v1029 = vld [vmem:[#allocation8 + $0x21c] sm:$0xff]
    %v1030 = vld [vmem:[#allocation8 + $0x224] sm:$0xf]
    %v1031 = vld [vmem:[#allocation8 + $0x228] sm:$0xff]
    %v1032 = vld [vmem:[#allocation8 + $0x230] sm:$0xf]
    %v1033 = vld [vmem:[#allocation8 + $0x234] sm:$0xff]
    %v1034 = vld [vmem:[#allocation8 + $0x23c] sm:$0xf]
    %v1035 = vld [vmem:[%s5] sm:$0x7]
    %v1037 = vlaneseq
    %v1038 = vshrl.u32 %v1037, 7
    %v1039 = vsub.s32 0, %v1038
    %v1040 = vrot.slane %v1035, %v1039
    %v1041 = vlaneseq
    %v1042 = vshrl.u32 %v1041, 7
    %v1043 = vsub.s32 1, %v1042
    %v1044 = vrot.slane %v1035, %v1043
    %v1045 = vlaneseq
    %v1046 = vshrl.u32 %v1045, 7
    %v1047 = vsub.s32 2, %v1046
    %v1048 = vrot.slane %v1035, %v1047
    %v1148 = vunpack.c.l.b16 %v939
    %v1149 = vunpack.c.h.b16 %v939
    %v1150 = vunpack.c.l.b16 %v940
    %v1151 = vunpack.c.l.b16 %v941
    %v1152 = vunpack.c.h.b16 %v941
    %v1153 = vunpack.c.l.b16 %v942
    %v1154 = vunpack.c.l.b16 %v943
    %v1155 = vunpack.c.h.b16 %v943
    %v1156 = vunpack.c.l.b16 %v944
    %v1157 = vunpack.c.l.b16 %v945
    %v1158 = vunpack.c.h.b16 %v945
    %v1159 = vunpack.c.l.b16 %v946
    %v1160 = vunpack.c.l.b16 %v947
    %v1161 = vunpack.c.h.b16 %v947
    %v1162 = vunpack.c.l.b16 %v948
    %v1163 = vunpack.c.l.b16 %v949
    %v1164 = vunpack.c.h.b16 %v949
    %v1165 = vunpack.c.l.b16 %v950
    %v1166 = vunpack.c.l.b16 %v951
    %v1167 = vunpack.c.h.b16 %v951
    %v1168 = vunpack.c.l.b16 %v952
    %v1169 = vunpack.c.l.b16 %v953
    %v1170 = vunpack.c.h.b16 %v953
    %v1171 = vunpack.c.l.b16 %v954
    %v1172 = vunpack.c.l.b16 %v955
    %v1173 = vunpack.c.h.b16 %v955
    %v1174 = vunpack.c.l.b16 %v956
    %v1175 = vunpack.c.l.b16 %v957
    %v1176 = vunpack.c.h.b16 %v957
    %v1177 = vunpack.c.l.b16 %v958
    %v1178 = vunpack.c.l.b16 %v959
    %v1179 = vunpack.c.h.b16 %v959
    %v1180 = vunpack.c.l.b16 %v960
    %v1181 = vunpack.c.l.b16 %v961
    %v1182 = vunpack.c.h.b16 %v961
    %v1183 = vunpack.c.l.b16 %v962
    %v1184 = vunpack.c.l.b16 %v963
    %v1185 = vunpack.c.h.b16 %v963
    %v1186 = vunpack.c.l.b16 %v964
    %v1187 = vunpack.c.l.b16 %v965
    %v1188 = vunpack.c.h.b16 %v965
    %v1189 = vunpack.c.l.b16 %v966
    %v1190 = vunpack.c.l.b16 %v967
    %v1191 = vunpack.c.h.b16 %v967
    %v1192 = vunpack.c.l.b16 %v968
    %v1193 = vunpack.c.l.b16 %v969
    %v1194 = vunpack.c.h.b16 %v969
    %v1195 = vunpack.c.l.b16 %v970
    %v1196 = vunpack.c.l.b16 %v971
    %v1197 = vunpack.c.h.b16 %v971
    %v1198 = vunpack.c.l.b16 %v972
    %v1199 = vunpack.c.l.b16 %v973
    %v1200 = vunpack.c.h.b16 %v973
    %v1201 = vunpack.c.l.b16 %v974
    %v1202 = vunpack.c.l.b16 %v975
    %v1203 = vunpack.c.h.b16 %v975
    %v1204 = vunpack.c.l.b16 %v976
    %v1205 = vunpack.c.l.b16 %v977
    %v1206 = vunpack.c.h.b16 %v977
    %v1207 = vunpack.c.l.b16 %v978
    %v1208 = vunpack.c.l.b16 %v979
    %v1209 = vunpack.c.h.b16 %v979
    %v1210 = vunpack.c.l.b16 %v980
    %v1211 = vunpack.c.l.b16 %v981
    %v1212 = vunpack.c.h.b16 %v981
    %v1213 = vunpack.c.l.b16 %v982
    %v1214 = vunpack.c.l.b16 %v983
    %v1215 = vunpack.c.h.b16 %v983
    %v1216 = vunpack.c.l.b16 %v984
    %v1217 = vunpack.c.l.b16 %v985
    %v1218 = vunpack.c.h.b16 %v985
    %v1219 = vunpack.c.l.b16 %v986
    %v1220 = vunpack.c.l.b16 %v987
    %v1221 = vunpack.c.h.b16 %v987
    %v1222 = vunpack.c.l.b16 %v988
    %v1223 = vunpack.c.l.b16 %v989
    %v1224 = vunpack.c.h.b16 %v989
    %v1225 = vunpack.c.l.b16 %v990
    %v1226 = vunpack.c.l.b16 %v991
    %v1227 = vunpack.c.h.b16 %v991
    %v1228 = vunpack.c.l.b16 %v992
    %v1229 = vunpack.c.l.b16 %v993
    %v1230 = vunpack.c.h.b16 %v993
    %v1231 = vunpack.c.l.b16 %v994
    %v1232 = vunpack.c.l.b16 %v995
    %v1233 = vunpack.c.h.b16 %v995
    %v1234 = vunpack.c.l.b16 %v996
    %v1235 = vunpack.c.l.b16 %v997
    %v1236 = vunpack.c.h.b16 %v997
    %v1237 = vunpack.c.l.b16 %v998
    %v1238 = vunpack.c.l.b16 %v999
    %v1239 = vunpack.c.h.b16 %v999
    %v1240 = vunpack.c.l.b16 %v1000
    %v1241 = vunpack.c.l.b16 %v1001
    %v1242 = vunpack.c.h.b16 %v1001
    %v1243 = vunpack.c.l.b16 %v1002
    %v1244 = vunpack.c.l.b16 %v1003
    %v1245 = vunpack.c.h.b16 %v1003
    %v1246 = vunpack.c.l.b16 %v1004
    %v1247 = vunpack.c.l.b16 %v1005
    %v1248 = vunpack.c.h.b16 %v1005
    %v1249 = vunpack.c.l.b16 %v1006
    %v1250 = vunpack.c.l.b16 %v1007
    %v1251 = vunpack.c.h.b16 %v1007
    %v1252 = vunpack.c.l.b16 %v1008
    %v1253 = vunpack.c.l.b16 %v1009
    %v1254 = vunpack.c.h.b16 %v1009
    %v1255 = vunpack.c.l.b16 %v1010
    %v1256 = vunpack.c.l.b16 %v1011
    %v1257 = vunpack.c.h.b16 %v1011
    %v1258 = vunpack.c.l.b16 %v1012
    %v1259 = vunpack.c.l.b16 %v1013
    %v1260 = vunpack.c.h.b16 %v1013
    %v1261 = vunpack.c.l.b16 %v1014
    %v1262 = vunpack.c.l.b16 %v1015
    %v1263 = vunpack.c.h.b16 %v1015
    %v1264 = vunpack.c.l.b16 %v1016
    %v1265 = vunpack.c.l.b16 %v1017
    %v1266 = vunpack.c.h.b16 %v1017
    %v1267 = vunpack.c.l.b16 %v1018
    %v1268 = vunpack.c.l.b16 %v1019
    %v1269 = vunpack.c.h.b16 %v1019
    %v1270 = vunpack.c.l.b16 %v1020
    %v1271 = vunpack.c.l.b16 %v1021
    %v1272 = vunpack.c.h.b16 %v1021
    %v1273 = vunpack.c.l.b16 %v1022
    %v1274 = vunpack.c.l.b16 %v1023
    %v1275 = vunpack.c.h.b16 %v1023
    %v1276 = vunpack.c.l.b16 %v1024
    %v1277 = vunpack.c.l.b16 %v1025
    %v1278 = vunpack.c.h.b16 %v1025
    %v1279 = vunpack.c.l.b16 %v1026
    %v1280 = vunpack.c.l.b16 %v1027
    %v1281 = vunpack.c.h.b16 %v1027
    %v1282 = vunpack.c.l.b16 %v1028
    %v1283 = vunpack.c.l.b16 %v1029
    %v1284 = vunpack.c.h.b16 %v1029
    %v1285 = vunpack.c.l.b16 %v1030
    %v1286 = vunpack.c.l.b16 %v1031
    %v1287 = vunpack.c.h.b16 %v1031
    %v1288 = vunpack.c.l.b16 %v1032
    %v1289 = vunpack.c.l.b16 %v1033
    %v1290 = vunpack.c.h.b16 %v1033
    %v1291 = vunpack.c.l.b16 %v1034
    %v1292 = vpack.c.b16 %v1151, %v1148
    %v1293 = vpack.c.b16 %v1152, %v1149
    %v1294 = vpack.c.b16 %v1153, %v1150
    %v1295 = vpack.c.b16 %v1157, %v1154
    %v1296 = vpack.c.b16 %v1158, %v1155
    %v1297 = vpack.c.b16 %v1159, %v1156
    %v1298 = vpack.c.b16 %v1163, %v1160
    %v1299 = vpack.c.b16 %v1164, %v1161
    %v1300 = vpack.c.b16 %v1165, %v1162
    %v1301 = vpack.c.b16 %v1169, %v1166
    %v1302 = vpack.c.b16 %v1170, %v1167
    %v1303 = vpack.c.b16 %v1171, %v1168
    %v1304 = vpack.c.b16 %v1175, %v1172
    %v1305 = vpack.c.b16 %v1176, %v1173
    %v1306 = vpack.c.b16 %v1177, %v1174
    %v1307 = vpack.c.b16 %v1181, %v1178
    %v1308 = vpack.c.b16 %v1182, %v1179
    %v1309 = vpack.c.b16 %v1183, %v1180
    %v1310 = vpack.c.b16 %v1187, %v1184
    %v1311 = vpack.c.b16 %v1188, %v1185
    %v1312 = vpack.c.b16 %v1189, %v1186
    %v1313 = vpack.c.b16 %v1193, %v1190
    %v1314 = vpack.c.b16 %v1194, %v1191
    %v1315 = vpack.c.b16 %v1195, %v1192
    %v1316 = vpack.c.b16 %v1199, %v1196
    %v1317 = vpack.c.b16 %v1200, %v1197
    %v1318 = vpack.c.b16 %v1201, %v1198
    %v1319 = vpack.c.b16 %v1205, %v1202
    %v1320 = vpack.c.b16 %v1206, %v1203
    %v1321 = vpack.c.b16 %v1207, %v1204
    %v1322 = vpack.c.b16 %v1211, %v1208
    %v1323 = vpack.c.b16 %v1212, %v1209
    %v1324 = vpack.c.b16 %v1213, %v1210
    %v1325 = vpack.c.b16 %v1217, %v1214
    %v1326 = vpack.c.b16 %v1218, %v1215
    %v1327 = vpack.c.b16 %v1219, %v1216
    %v1328 = vpack.c.b16 %v1223, %v1220
    %v1329 = vpack.c.b16 %v1224, %v1221
    %v1330 = vpack.c.b16 %v1225, %v1222
    %v1331 = vpack.c.b16 %v1229, %v1226
    %v1332 = vpack.c.b16 %v1230, %v1227
    %v1333 = vpack.c.b16 %v1231, %v1228
    %v1334 = vpack.c.b16 %v1235, %v1232
    %v1335 = vpack.c.b16 %v1236, %v1233
    %v1336 = vpack.c.b16 %v1237, %v1234
    %v1337 = vpack.c.b16 %v1241, %v1238
    %v1338 = vpack.c.b16 %v1242, %v1239
    %v1339 = vpack.c.b16 %v1243, %v1240
    %v1340 = vpack.c.b16 %v1247, %v1244
    %v1341 = vpack.c.b16 %v1248, %v1245
    %v1342 = vpack.c.b16 %v1249, %v1246
    %v1343 = vpack.c.b16 %v1253, %v1250
    %v1344 = vpack.c.b16 %v1254, %v1251
    %v1345 = vpack.c.b16 %v1255, %v1252
    %v1346 = vpack.c.b16 %v1259, %v1256
    %v1347 = vpack.c.b16 %v1260, %v1257
    %v1348 = vpack.c.b16 %v1261, %v1258
    %v1349 = vpack.c.b16 %v1265, %v1262
    %v1350 = vpack.c.b16 %v1266, %v1263
    %v1351 = vpack.c.b16 %v1267, %v1264
    %v1352 = vpack.c.b16 %v1271, %v1268
    %v1353 = vpack.c.b16 %v1272, %v1269
    %v1354 = vpack.c.b16 %v1273, %v1270
    %v1355 = vpack.c.b16 %v1277, %v1274
    %v1356 = vpack.c.b16 %v1278, %v1275
    %v1357 = vpack.c.b16 %v1279, %v1276
    %v1358 = vpack.c.b16 %v1283, %v1280
    %v1359 = vpack.c.b16 %v1284, %v1281
    %v1360 = vpack.c.b16 %v1285, %v1282
    %v1361 = vpack.c.b16 %v1289, %v1286
    %v1362 = vpack.c.b16 %v1290, %v1287
    %v1363 = vpack.c.b16 %v1291, %v1288
    %1436 = vmatprep.subr.bf16.mxu0 %v1293
    %1437 = vmatpush1.bf16.msra.mxu0 %v1292
    %1438 = vmatprep.subr.bf16.mxu0 %v1296
    %1439 = vmatpush1.bf16.msra.mxu0 %v1295
    %1440 = vmatprep.subr.bf16.mxu0 %v1299
    %1441 = vmatpush1.bf16.msra.mxu0 %v1298
    %1442 = vmatprep.subr.bf16.mxu0 %v1302
    %1443 = vmatpush1.bf16.msra.mxu0 %v1301
    %1444 = vmatprep.subr.bf16.mxu0 %v1305
    %1445 = vmatpush1.bf16.msra.mxu0 %v1304
    %1446 = vmatprep.subr.bf16.mxu0 %v1308
    %1447 = vmatpush1.bf16.msra.mxu0 %v1307
    %1448 = vmatprep.subr.bf16.mxu0 %v1311
    %1449 = vmatpush1.bf16.msra.mxu0 %v1310
    %1450 = vmatprep.subr.bf16.mxu0 %v1314
    %1451 = vmatpush1.bf16.msra.mxu0 %v1313
    %1452 = vmatprep.subr.bf16.mxu0 %v1317
    %1453 = vmatpush1.bf16.msra.mxu0 %v1316
    %1454 = vmatprep.subr.bf16.mxu0 %v1320
    %1455 = vmatpush1.bf16.msra.mxu0 %v1319
    %1456 = vmatprep.subr.bf16.mxu0 %v1323
    %1457 = vmatpush1.bf16.msra.mxu0 %v1322
    %1458 = vmatprep.subr.bf16.mxu0 %v1326
    %1459 = vmatpush1.bf16.msra.mxu0 %v1325
    %1460 = vmatprep.subr.bf16.mxu0 %v1329
    %1461 = vmatpush1.bf16.msra.mxu0 %v1328
    %1462 = vmatprep.subr.bf16.mxu0 %v1332
    %1463 = vmatpush1.bf16.msra.mxu0 %v1331
    %1464 = vmatprep.subr.bf16.mxu0 %v1335
    %1465 = vmatpush1.bf16.msra.mxu0 %v1334
    %1466 = vmatprep.subr.bf16.mxu0 %v1338
    %1467 = vmatpush1.bf16.msra.mxu0 %v1337
    %1468 = vmatprep.mubr.bf16.mxu0 %v937
    %1469 = vmatmul.mubr.bf16.gmra.mrb[0].mxu0 %v936
    %v1470 = vpop.f32.mrb[0].mxu0
    %v1471 = vadd.f32 %v1040, %v1470
    %v1472 = vpop.f32.mrb[0].mxu0
    %v1473 = vadd.f32 %v1044, %v1472
    %v1474 = vpop.f32.mrb[0].mxu0
    %v1475 = vpop.f32.mrb[0].mxu0
    %1476 = vdwg.mxu0
    %1477 = vmatprep.subr.bf16.mxu0 %v1341
    %1478 = vmatpush1.bf16.msra.mxu0 %v1340
    %1479 = vmatprep.subr.bf16.mxu0 %v1344
    %1480 = vmatpush1.bf16.msra.mxu0 %v1343
    %1481 = vmatprep.subr.bf16.mxu0 %v1347
    %1482 = vmatpush1.bf16.msra.mxu0 %v1346
    %1483 = vmatprep.subr.bf16.mxu0 %v1350
    %1484 = vmatpush1.bf16.msra.mxu0 %v1349
    %1485 = vmatprep.subr.bf16.mxu0 %v1353
    %1486 = vmatpush1.bf16.msra.mxu0 %v1352
    %1487 = vmatprep.subr.bf16.mxu0 %v1356
    %1488 = vmatpush1.bf16.msra.mxu0 %v1355
    %1489 = vmatprep.subr.bf16.mxu0 %v1359
    %1490 = vmatpush1.bf16.msra.mxu0 %v1358
    %1491 = vmatprep.subr.bf16.mxu0 %v1362
    %1492 = vmatpush1.bf16.msra.mxu0 %v1361
    %1493 = vmatprep.subr.bf16.mxu0 0
    %1494 = vmatpush1.bf16.msra.mxu0 0
    %1495 = vmatprep.subr.bf16.mxu0 0
    %1496 = vmatpush1.bf16.msra.mxu0 0
    %1497 = vmatprep.subr.bf16.mxu0 0
    %1498 = vmatpush1.bf16.msra.mxu0 0
    %1499 = vmatprep.subr.bf16.mxu0 0
    %1500 = vmatpush1.bf16.msra.mxu0 0
    %1501 = vmatprep.subr.bf16.mxu0 0
    %1502 = vmatpush1.bf16.msra.mxu0 0
    %1503 = vmatprep.subr.bf16.mxu0 0
    %1504 = vmatpush1.bf16.msra.mxu0 0
    %1505 = vmatprep.subr.bf16.mxu0 0
    %1506 = vmatpush1.bf16.msra.mxu0 0
    %1507 = vmatprep.subr.bf16.mxu0 0
    %1508 = vmatpush1.bf16.msra.mxu0 0
    %1509 = vmatprep.mubr.bf16.mxu0 0
    %1510 = vmatmul.mubr.bf16.gmra.mrb[0].mxu0 %v938
    %v1511 = vpop.f32.mrb[0].mxu0
    %v1512 = vadd.f32 %v1471, %v1511
    %v1513 = vpop.f32.mrb[0].mxu0
    %v1514 = vadd.f32 %v1473, %v1513
    %v1515 = vpop.f32.mrb[0].mxu0
    %v1516 = vpop.f32.mrb[0].mxu0
    %1517 = vdwg.mxu0
    %1518 = vmatprep.subr.bf16.mxu0 0
    %1519 = vmatpush1.bf16.msra.mxu0 %v1294
    %1520 = vmatprep.subr.bf16.mxu0 0
    %1521 = vmatpush1.bf16.msra.mxu0 %v1297
    %1522 = vmatprep.subr.bf16.mxu0 0
    %1523 = vmatpush1.bf16.msra.mxu0 %v1300
    %1524 = vmatprep.subr.bf16.mxu0 0
    %1525 = vmatpush1.bf16.msra.mxu0 %v1303
    %1526 = vmatprep.subr.bf16.mxu0 0
    %1527 = vmatpush1.bf16.msra.mxu0 %v1306
    %1528 = vmatprep.subr.bf16.mxu0 0
    %1529 = vmatpush1.bf16.msra.mxu0 %v1309
    %1530 = vmatprep.subr.bf16.mxu0 0
    %1531 = vmatpush1.bf16.msra.mxu0 %v1312
    %1532 = vmatprep.subr.bf16.mxu0 0
    %1533 = vmatpush1.bf16.msra.mxu0 %v1315
    %1534 = vmatprep.subr.bf16.mxu0 0
    %1535 = vmatpush1.bf16.msra.mxu0 %v1318
    %1536 = vmatprep.subr.bf16.mxu0 0
    %1537 = vmatpush1.bf16.msra.mxu0 %v1321
    %1538 = vmatprep.subr.bf16.mxu0 0
    %1539 = vmatpush1.bf16.msra.mxu0 %v1324
    %1540 = vmatprep.subr.bf16.mxu0 0
    %1541 = vmatpush1.bf16.msra.mxu0 %v1327
    %1542 = vmatprep.subr.bf16.mxu0 0
    %1543 = vmatpush1.bf16.msra.mxu0 %v1330
    %1544 = vmatprep.subr.bf16.mxu0 0
    %1545 = vmatpush1.bf16.msra.mxu0 %v1333
    %1546 = vmatprep.subr.bf16.mxu0 0
    %1547 = vmatpush1.bf16.msra.mxu0 %v1336
    %1548 = vmatprep.subr.bf16.mxu0 0
    %1549 = vmatpush1.bf16.msra.mxu0 %v1339
    %1550 = vmatprep.mubr.bf16.mxu0 %v937
    %1551 = vmatmul.mubr.bf16.gmra.mrb[0].mxu0 %v936
    %v1552 = vpop.f32.mrb[0].mxu0
    %v1553 = vadd.f32 %v1048, %v1552
    %v1554 = vpop.f32.mrb[0].mxu0
    %v1555 = vpop.f32.mrb[0].mxu0
    %v1556 = vpop.f32.mrb[0].mxu0
    %1557 = vdwg.mxu0
    %1558 = vmatprep.subr.bf16.mxu0 0
    %1559 = vmatpush1.bf16.msra.mxu0 %v1342
    %1560 = vmatprep.subr.bf16.mxu0 0
    %1561 = vmatpush1.bf16.msra.mxu0 %v1345
    %1562 = vmatprep.subr.bf16.mxu0 0
    %1563 = vmatpush1.bf16.msra.mxu0 %v1348
    %1564 = vmatprep.subr.bf16.mxu0 0
    %1565 = vmatpush1.bf16.msra.mxu0 %v1351
    %1566 = vmatprep.subr.bf16.mxu0 0
    %1567 = vmatpush1.bf16.msra.mxu0 %v1354
    %1568 = vmatprep.subr.bf16.mxu0 0
    %1569 = vmatpush1.bf16.msra.mxu0 %v1357
    %1570 = vmatprep.subr.bf16.mxu0 0
    %1571 = vmatpush1.bf16.msra.mxu0 %v1360
    %1572 = vmatprep.subr.bf16.mxu0 0
    %1573 = vmatpush1.bf16.msra.mxu0 %v1363
    %1574 = vmatprep.subr.bf16.mxu0 0
    %1575 = vmatpush1.bf16.msra.mxu0 0
    %1576 = vmatprep.subr.bf16.mxu0 0
    %1577 = vmatpush1.bf16.msra.mxu0 0
    %1578 = vmatprep.subr.bf16.mxu0 0
    %1579 = vmatpush1.bf16.msra.mxu0 0
    %1580 = vmatprep.subr.bf16.mxu0 0
    %1581 = vmatpush1.bf16.msra.mxu0 0
    %1582 = vmatprep.subr.bf16.mxu0 0
    %1583 = vmatpush1.bf16.msra.mxu0 0
    %1584 = vmatprep.subr.bf16.mxu0 0
    %1585 = vmatpush1.bf16.msra.mxu0 0
    %1586 = vmatprep.subr.bf16.mxu0 0
    %1587 = vmatpush1.bf16.msra.mxu0 0
    %1588 = vmatprep.subr.bf16.mxu0 0
    %1589 = vmatpush1.bf16.msra.mxu0 0
    %1590 = vmatprep.mubr.bf16.mxu0 0
    %1591 = vmatmul.mubr.bf16.gmra.mrb[0].mxu0 %v938
    %v1592 = vpop.f32.mrb[0].mxu0
    %v1593 = vadd.f32 %v1553, %v1592
    %v1594 = vpop.f32.mrb[0].mxu0
    %v1595 = vpop.f32.mrb[0].mxu0
    %v1596 = vpop.f32.mrb[0].mxu0
    %1597 = vdwg.mxu0
    %v1598 = vsub.f32 0.0, %v1512
    %v1599 = vsub.f32 0.0, %v1514
    %v1600 = vsub.f32 0.0, %v1593
    %v1601 = vmul.f32 %v1598, 1.442695
    %v1602 = vpow.pop %v1601
    %v1603 = vmul.f32 %v1599, 1.442695
    %v1604 = vpow.pop %v1603
    %v1605 = vmul.f32 %v1600, 1.442695
    %v1606 = vpow.pop %v1605
    %v1607 = vadd.f32 %v1602, 1.0
    %v1608 = vadd.f32 %v1604, 1.0
    %v1609 = vadd.f32 %v1606, 1.0
    %v1610 = vrcp.pop %v1607
    %v1611 = vrcp.pop %v1608
    %v1612 = vrcp.pop %v1609
    %v1613 = vld [vmem:[#allocation10] sm:$0xff]
    %v1614 = vld [vmem:[#allocation10 + $0x8] sm:$0xff]
    %v1615 = vld [vmem:[#allocation10 + $0x10] sm:$0xff]
    %v1616 = vld [vmem:[#allocation10 + $0x18] sm:$0xff]
    %v1617 = vld [vmem:[#allocation10 + $0x20] sm:$0xff]
    %v1618 = vld [vmem:[#allocation10 + $0x28] sm:$0xff]
    %v1619 = vld [vmem:[#allocation10 + $0x30] sm:$0xff]
    %v1620 = vld [vmem:[#allocation10 + $0x38] sm:$0xff]
    %v1621 = vld [vmem:[#allocation10 + $0x40] sm:$0xff]
    %v1622 = vld [vmem:[#allocation10 + $0x48] sm:$0xff]
    %v1623 = vld [vmem:[#allocation10 + $0x50] sm:$0xff]
    %v1624 = vld [vmem:[#allocation10 + $0x58] sm:$0xff]
    %v1625 = vld [vmem:[#allocation10 + $0x60] sm:$0xff]
    %v1626 = vld [vmem:[#allocation10 + $0x68] sm:$0xff]
    %v1627 = vld [vmem:[#allocation10 + $0x70] sm:$0xff]
    %v1628 = vld [vmem:[#allocation10 + $0x78] sm:$0xff]
    %v1629 = vld [vmem:[#allocation10 + $0x80] sm:$0xff]
    %v1630 = vld [vmem:[#allocation10 + $0x88] sm:$0xff]
    %v1631 = vld [vmem:[#allocation10 + $0x90] sm:$0xff]
    %v1632 = vld [vmem:[#allocation10 + $0x98] sm:$0xff]
    %v1633 = vld [vmem:[#allocation10 + $0xa0] sm:$0xff]
    %v1634 = vld [vmem:[#allocation10 + $0xa8] sm:$0xff]
    %v1635 = vld [vmem:[#allocation10 + $0xb0] sm:$0xff]
    %v1636 = vld [vmem:[#allocation10 + $0xb8] sm:$0xff]
    %v1637 = vld [vmem:[#allocation10 + $0xc0] sm:$0xff]
    %v1638 = vld [vmem:[#allocation10 + $0xc8] sm:$0xff]
    %v1639 = vld [vmem:[#allocation10 + $0xd0] sm:$0xff]
    %v1640 = vld [vmem:[#allocation10 + $0xd8] sm:$0xff]
    %v1641 = vld [vmem:[#allocation10 + $0xe0] sm:$0xff]
    %v1642 = vld [vmem:[#allocation10 + $0xe8] sm:$0xff]
    %v1643 = vld [vmem:[#allocation10 + $0xf0] sm:$0xff]
    %v1644 = vld [vmem:[#allocation10 + $0xf8] sm:$0xff]
    %v1645 = vld [vmem:[#allocation10 + $0x100] sm:$0xff]
    %v1646 = vld [vmem:[#allocation10 + $0x108] sm:$0xff]
    %v1647 = vld [vmem:[#allocation10 + $0x110] sm:$0xff]
    %v1648 = vld [vmem:[#allocation10 + $0x118] sm:$0xff]
    %v1649 = vld [vmem:[#allocation10 + $0x120] sm:$0xff]
    %v1650 = vld [vmem:[#allocation10 + $0x128] sm:$0xff]
    %v1651 = vld [vmem:[#allocation10 + $0x130] sm:$0xff]
    %v1652 = vld [vmem:[#allocation10 + $0x138] sm:$0xff]
    %v1653 = vld [vmem:[#allocation10 + $0x140] sm:$0xff]
    %v1654 = vld [vmem:[#allocation10 + $0x148] sm:$0xff]
    %v1655 = vld [vmem:[#allocation10 + $0x150] sm:$0xff]
    %v1656 = vld [vmem:[#allocation10 + $0x158] sm:$0xff]
    %v1657 = vld [vmem:[#allocation10 + $0x160] sm:$0xff]
    %v1658 = vld [vmem:[#allocation10 + $0x168] sm:$0xff]
    %v1659 = vld [vmem:[#allocation10 + $0x170] sm:$0xff]
    %v1660 = vld [vmem:[#allocation10 + $0x178] sm:$0xff]
    %v1661 = vld [vmem:[%s7] sm:$0x1]
    %v1663 = vlaneseq
    %v1664 = vshrl.u32 %v1663, 7
    %v1665 = vsub.s32 0, %v1664
    %v1666 = vrot.slane %v1661, %v1665
    %1668 = vmatprep.subr.mxu0 0.0
    %1669 = vmatpush1.msra.mxu0 %v1613
    %1670 = vmatprep.subr.mxu0 0.0
    %1671 = vmatpush1.msra.mxu0 %v1614
    %1672 = vmatprep.subr.mxu0 0.0
    %1673 = vmatpush1.msra.mxu0 %v1615
    %1674 = vmatprep.subr.mxu0 0.0
    %1675 = vmatpush1.msra.mxu0 %v1616
    %1676 = vmatprep.subr.mxu0 0.0
    %1677 = vmatpush1.msra.mxu0 %v1617
    %1678 = vmatprep.subr.mxu0 0.0
    %1679 = vmatpush1.msra.mxu0 %v1618
    %1680 = vmatprep.subr.mxu0 0.0
    %1681 = vmatpush1.msra.mxu0 %v1619
    %1682 = vmatprep.subr.mxu0 0.0
    %1683 = vmatpush1.msra.mxu0 %v1620
    %1684 = vmatprep.subr.mxu0 0.0
    %1685 = vmatpush1.msra.mxu0 %v1621
    %1686 = vmatprep.subr.mxu0 0.0
    %1687 = vmatpush1.msra.mxu0 %v1622
    %1688 = vmatprep.subr.mxu0 0.0
    %1689 = vmatpush1.msra.mxu0 %v1623
    %1690 = vmatprep.subr.mxu0 0.0
    %1691 = vmatpush1.msra.mxu0 %v1624
    %1692 = vmatprep.subr.mxu0 0.0
    %1693 = vmatpush1.msra.mxu0 %v1625
    %1694 = vmatprep.subr.mxu0 0.0
    %1695 = vmatpush1.msra.mxu0 %v1626
    %1696 = vmatprep.subr.mxu0 0.0
    %1697 = vmatpush1.msra.mxu0 %v1627
    %1698 = vmatprep.subr.mxu0 0.0
    %1699 = vmatpush1.msra.mxu0 %v1628
    %1700 = vmatprep.subr.mxu0 0.0
    %1701 = vmatpush1.msra.mxu0 %v1629
    %1702 = vmatprep.subr.mxu0 0.0
    %1703 = vmatpush1.msra.mxu0 %v1630
    %1704 = vmatprep.subr.mxu0 0.0
    %1705 = vmatpush1.msra.mxu0 %v1631
    %1706 = vmatprep.subr.mxu0 0.0
    %1707 = vmatpush1.msra.mxu0 %v1632
    %1708 = vmatprep.subr.mxu0 0.0
    %1709 = vmatpush1.msra.mxu0 %v1633
    %1710 = vmatprep.subr.mxu0 0.0
    %1711 = vmatpush1.msra.mxu0 %v1634
    %1712 = vmatprep.subr.mxu0 0.0
    %1713 = vmatpush1.msra.mxu0 %v1635
    %1714 = vmatprep.subr.mxu0 0.0
    %1715 = vmatpush1.msra.mxu0 %v1636
    %1716 = vmatprep.subr.mxu0 0.0
    %1717 = vmatpush1.msra.mxu0 %v1637
    %1718 = vmatprep.subr.mxu0 0.0
    %1719 = vmatpush1.msra.mxu0 %v1638
    %1720 = vmatprep.subr.mxu0 0.0
    %1721 = vmatpush1.msra.mxu0 %v1639
    %1722 = vmatprep.subr.mxu0 0.0
    %1723 = vmatpush1.msra.mxu0 %v1640
    %1724 = vmatprep.subr.mxu0 0.0
    %1725 = vmatpush1.msra.mxu0 %v1641
    %1726 = vmatprep.subr.mxu0 0.0
    %1727 = vmatpush1.msra.mxu0 %v1642
    %1728 = vmatprep.subr.mxu0 0.0
    %1729 = vmatpush1.msra.mxu0 %v1643
    %1730 = vmatprep.subr.mxu0 0.0
    %1731 = vmatpush1.msra.mxu0 %v1644
    %1732 = vmatprep.mubr.f32.mxu0 %v1611
    %1733 = vmatmul.mubr.f32.gmra.mrb[0].mxu0 %v1610
    %v1734 = vpop.f32.mrb[0].mxu0
    %v1735 = vadd.f32 %v1666, %v1734
    %v1736 = vpop.f32.mrb[0].mxu0
    %1737 = vdwg.mxu0
    %1738 = vmatprep.subr.mxu0 0.0
    %1739 = vmatpush1.msra.mxu0 %v1645
    %1740 = vmatprep.subr.mxu0 0.0
    %1741 = vmatpush1.msra.mxu0 %v1646
    %1742 = vmatprep.subr.mxu0 0.0
    %1743 = vmatpush1.msra.mxu0 %v1647
    %1744 = vmatprep.subr.mxu0 0.0
    %1745 = vmatpush1.msra.mxu0 %v1648
    %1746 = vmatprep.subr.mxu0 0.0
    %1747 = vmatpush1.msra.mxu0 %v1649
    %1748 = vmatprep.subr.mxu0 0.0
    %1749 = vmatpush1.msra.mxu0 %v1650
    %1750 = vmatprep.subr.mxu0 0.0
    %1751 = vmatpush1.msra.mxu0 %v1651
    %1752 = vmatprep.subr.mxu0 0.0
    %1753 = vmatpush1.msra.mxu0 %v1652
    %1754 = vmatprep.subr.mxu0 0.0
    %1755 = vmatpush1.msra.mxu0 %v1653
    %1756 = vmatprep.subr.mxu0 0.0
    %1757 = vmatpush1.msra.mxu0 %v1654
    %1758 = vmatprep.subr.mxu0 0.0
    %1759 = vmatpush1.msra.mxu0 %v1655
    %1760 = vmatprep.subr.mxu0 0.0
    %1761 = vmatpush1.msra.mxu0 %v1656
    %1762 = vmatprep.subr.mxu0 0.0
    %1763 = vmatpush1.msra.mxu0 %v1657
    %1764 = vmatprep.subr.mxu0 0.0
    %1765 = vmatpush1.msra.mxu0 %v1658
    %1766 = vmatprep.subr.mxu0 0.0
    %1767 = vmatpush1.msra.mxu0 %v1659
    %1768 = vmatprep.subr.mxu0 0.0
    %1769 = vmatpush1.msra.mxu0 %v1660
    %1770 = vmatprep.subr.mxu0 0.0
    %1771 = vmatpush1.msra.mxu0 0.0
    %1772 = vmatprep.subr.mxu0 0.0
    %1773 = vmatpush1.msra.mxu0 0.0
    %1774 = vmatprep.subr.mxu0 0.0
    %1775 = vmatpush1.msra.mxu0 0.0
    %1776 = vmatprep.subr.mxu0 0.0
    %1777 = vmatpush1.msra.mxu0 0.0
    %1778 = vmatprep.subr.mxu0 0.0
    %1779 = vmatpush1.msra.mxu0 0.0
    %1780 = vmatprep.subr.mxu0 0.0
    %1781 = vmatpush1.msra.mxu0 0.0
    %1782 = vmatprep.subr.mxu0 0.0
    %1783 = vmatpush1.msra.mxu0 0.0
    %1784 = vmatprep.subr.mxu0 0.0
    %1785 = vmatpush1.msra.mxu0 0.0
    %1786 = vmatprep.subr.mxu0 0.0
    %1787 = vmatpush1.msra.mxu0 0.0
    %1788 = vmatprep.subr.mxu0 0.0
    %1789 = vmatpush1.msra.mxu0 0.0
    %1790 = vmatprep.subr.mxu0 0.0
    %1791 = vmatpush1.msra.mxu0 0.0
    %1792 = vmatprep.subr.mxu0 0.0
    %1793 = vmatpush1.msra.mxu0 0.0
    %1794 = vmatprep.subr.mxu0 0.0
    %1795 = vmatpush1.msra.mxu0 0.0
    %1796 = vmatprep.subr.mxu0 0.0
    %1797 = vmatpush1.msra.mxu0 0.0
    %1798 = vmatprep.subr.mxu0 0.0
    %1799 = vmatpush1.msra.mxu0 0.0
    %1800 = vmatprep.subr.mxu0 0.0
    %1801 = vmatpush1.msra.mxu0 0.0
    %1802 = vmatprep.mubr.f32.mxu0 0.0
    %1803 = vmatmul.mubr.f32.gmra.mrb[0].mxu0 %v1612
    %v1804 = vpop.f32.mrb[0].mxu0
    %v1805 = vadd.f32 %v1735, %v1804
    %v1806 = vpop.f32.mrb[0].mxu0
    %1807 = vdwg.mxu0
    %v1808 = vsub.f32 0.0, %v1805
    %v1809 = vmul.f32 %v1808, 1.442695
    %v1810 = vpow.pop %v1809
    %v1811 = vadd.f32 %v1810, 1.0
    %v1812 = vrcp.pop %v1811
    %1813 = vst [vmem:[#allocation11] sm:$0xff] %v1812
    // Predicated region
    $region54: #{tpu_custom_call.1} parent=1 // pred_check
      _
    $region55: #{tpu_custom_call.1} parent=1 // pred_check_branch
      %1815 = sbr.rel (0) target = $region57
    $region56: #{tpu_custom_call.1} parent=1 // pred_region
      %s1817 = ssub.s32 128, 128
      %1818 = vsyncadd [#allocation4], %s1817
      %s1820 = sshll.u32 [#allocation11], 4
      %s1821 = int_to_ptr.vmem [resolvable:$true] %s1820
      %1823 = dma.vmem_to_hbm [thread:$0]  %s1821, 128, %s8, [#allocation4]
    $region57: #{tpu_custom_call.1} parent=1 // pred_fallthru
      _
    // Predicated region
    $region58: #{tpu_custom_call.1} parent=1 // pred_check
      _
    $region59: #{tpu_custom_call.1} parent=1 // pred_check_branch
      %1825 = sbr.rel (0) target = $region61
    $region60: #{tpu_custom_call.1} parent=1 // pred_region
      %1826 = dma.done [#allocation4], 128
    $region61: #{tpu_custom_call.1} parent=1 // pred_fallthru
      _
    %1827 = vsyncpa [#allocation3], 1
    %1828 = vsyncpa [#allocation6], 1
    %1829 = vsyncpa [#allocation9], 1
    %1830 = vsyncpa [#allocation4], 1

</llo_original>
